<compile_context>
chip_gen: v7x
topology: tpu7x:2x2x1
jax: 0.10.0
libtpu: 0.0.40
codegen_flags: <defaults>
</compile_context>

<pallas_src>
import jax
import jax.numpy as jnp
from jax.experimental import pallas as pl
from jax.experimental.pallas import tpu as pltpu


def _round_up(x, m):
    return (x + m - 1) // m * m


# ----------------------------- Pallas kernel -------------------------------
def _sigmoid(z):
    # exp on the EUP + approximate reciprocal on the EUP: divide stays off VPU.
    return pl.reciprocal(1.0 + jnp.exp(-z), approx=True)


def dde_kernel(s_ref, dx_ref, x_ref, ra_ref, ba_ref, rc_ref, bc_ref,
               rb_ref, bb_ref, o_ref):
    Hp = o_ref.shape[-1]

    s = s_ref[...]                                   # (tm, Hp)   bf16
    dx = dx_ref[...]                                 # (tm, Din)  bf16
    x = x_ref[...].astype(jnp.float32)               # (tm, Hp)

    # pass 1a: [y1 | gate pre-act] = s @ [w_eff | w_eff@wg]   (bf16 in, f32 acc)
    za = jnp.dot(s, ra_ref[...], preferred_element_type=jnp.float32)
    za = za + ba_ref[...]
    y1 = za[:, :Hp]                                  # 128-lane aligned slices
    gate = _sigmoid(za[:, Hp:])

    # pass 1b (thin): trans_control(dx_dt) = dx @ wc + bc
    dxh = jnp.dot(dx, rc_ref[...], preferred_element_type=jnp.float32)
    dxh = dxh + bc_ref[...]

    # y = (1 - gate) * (y - x);  y = y * dx_dt          (f32 elementwise)
    y3 = (1.0 - gate) * (y1 - x) * dxh

    # pass 2: [y4 | gate_out pre-act] = relu(y) @ [wty | wty@wgo]
    zb = jnp.dot(jnp.maximum(y3, 0.0).astype(jnp.bfloat16), rb_ref[...],
                 preferred_element_type=jnp.float32)
    zb = zb + bb_ref[...]
    y4 = zb[:, :Hp]
    go = _sigmoid(zb[:, Hp:])

    o_ref[...] = (go * y4).astype(o_ref.dtype)


# ------------------------------ tiling helper -------------------------------
def _pick_tm(M, Hp, Din, max_rows_per_step, vmem_budget_bytes):
    # bf16 packs 16 rows per sublane group -> round row tiles to 16.
    Mp = _round_up(M, 16)
    tm = min(Mp, _round_up(max_rows_per_step, 16))
    # v7x has 2 TensorCores: ensure >= 2 "parallel" grid steps when there is
    # enough work for two tiles.
    if Mp // tm < 2 and Mp >= 32:
        tm = _round_up((Mp + 1) // 2, 16)
    # Budget tm against the most conservative default scoped VMEM (16 MiB on
    # v5e; 32 MiB default / 64 MiB physical on v7x).  Constants counted at
    # worst-case double buffering; streamed rows double buffered.
    const_bytes = 2 * (2 * (Hp * 2 * Hp * 2)        # ra, rb  (bf16)
                       + Din * Hp * 2               # rc      (bf16)
                       + (2 * Hp + Hp + 2 * Hp) * 4)  # biases (f32)
    row_bytes = 2 * (Hp * 2 + Din * 2 + Hp * 2 + Hp * 4)  # s, dx, x, out
    avail = max(vmem_budget_bytes - const_bytes, 16 * row_bytes)
    tm_cap = max(16, (avail // row_bytes) // 16 * 16)
    return min(tm, tm_cap)


def dde_dense(s, dx, x, ra, ba, rc, bcp, rb, bb, *, max_rows_per_step=1024,
              vmem_budget_bytes=12 << 20):
    """Dense portion of DDEFunc.forward on flattened rows (M = N*B)."""
    M, Hp = x.shape
    Din = dx.shape[1]

    tm = _pick_tm(M, Hp, Din, max_rows_per_step, vmem_budget_bytes)
    Mp = _round_up(M, tm)
    if Mp != M:
        pad = Mp - M
        s = jnp.pad(s, ((0, pad), (0, 0)))
        dx = jnp.pad(dx, ((0, pad), (0, 0)))
        x = jnp.pad(x, ((0, pad), (0, 0)))
    grid = Mp // tm

    def run(single_buffer_consts):
        row = lambda cols: pl.BlockSpec((tm, cols), lambda i: (i, 0))
        if single_buffer_consts:
            # constant index_map -> double buffering is pure VMEM waste
            const = lambda r, c: pl.BlockSpec((r, c), lambda i: (0, 0),
                                              pipeline_mode=pl.Buffered(1))
        else:
            const = lambda r, c: pl.BlockSpec((r, c), lambda i: (0, 0))
        out = pl.pallas_call(
            dde_kernel,
            out_shape=jax.ShapeDtypeStruct((Mp, Hp), jnp.float32),
            grid_spec=pltpu.PrefetchScalarGridSpec(
                num_scalar_prefetch=0,
                grid=(grid,),
                in_specs=[row(Hp),                 # s   (bf16, lane-dense)
                          row(Din),                # dx  (bf16)
                          row(Hp),                 # x   (bf16, lane-dense)
                          const(Hp, 2 * Hp),       # [w_eff | w_eff@wg]   bf16
                          const(1, 2 * Hp),        # [0 | bg]             f32
                          const(Din, Hp),          # wc                   bf16
                          const(1, Hp),            # bc                   f32
                          const(Hp, 2 * Hp),       # [wty | wty@wgo]      bf16
                          const(1, 2 * Hp)],       # [bty | bty@wgo+bgo]  f32
                out_specs=row(Hp)),
            compiler_params=pltpu.CompilerParams(
                dimension_semantics=("parallel",)),
        )(s, dx, x, ra, ba, rc, bcp, rb, bb)
        return jax.block_until_ready(out)

    try:
        out = run(True)
    except Exception:
        # pipeline_mode=pl.Buffered(1) not supported here -> default buffering
        out = run(False)
    return out[:M]


# ----------------------- parameter fusion (host side) -----------------------
def fuse_params(d_param, w_param, lin_params):
    """Fold DDEFunc dense parameters into lane-padded bf16 blocks (f32 fusion)."""
    wg, bg, wc, bc, wty, bty, wgo, bgo = lin_params
    H = w_param.shape[0]
    Din = wc.shape[0]
    Hp = _round_up(H, 128)

    d = jnp.clip(d_param, 0.0, 1.0)
    w_eff = (w_param * d[None, :]) @ w_param.T          # torch.mm(w * d, w.T)

    # pass-1a block: [w_eff | w_eff@wg], rows/cols zero-padded to Hp lanes
    ra = jnp.zeros((Hp, 2 * Hp), jnp.float32)
    ra = ra.at[:H, :H].set(w_eff)
    ra = ra.at[:H, Hp:Hp + H].set(w_eff @ wg)
    ba = jnp.zeros((1, 2 * Hp), jnp.float32).at[:, Hp:Hp + H].set(bg)

    # pass-1b block: trans_control weight (thin contraction over Din)
    rc = jnp.zeros((Din, Hp), jnp.float32).at[:, :H].set(wc)
    bcp = jnp.zeros((1, Hp), jnp.float32).at[:, :H].set(bc)

    # pass-2 block: [wty | wty@wgo]
    rb = jnp.zeros((Hp, 2 * Hp), jnp.float32)
    rb = rb.at[:H, :H].set(wty)
    rb = rb.at[:H, Hp:Hp + H].set(wty @ wgo)
    bb = jnp.zeros((1, 2 * Hp), jnp.float32)
    bb = bb.at[:, :H].set(bty)
    bb = bb.at[:, Hp:Hp + H].set(bty @ wgo + bgo)

    return (ra.astype(jnp.bfloat16), ba, rc.astype(jnp.bfloat16), bcp,
            rb.astype(jnp.bfloat16), bb, Hp)


# ----------------------------- JAX glue (graph) -----------------------------
def dde_forward(graph, x, dx_dt_raw, t, step_size, pparams):
    """Replicates DDEFunc.forward.

    graph: dict with
      'state' : (N, T, B, H) node history
      'src','dst' : (E,) int32 edge endpoints
      'delay' : (E,) float edge delays
      'w'     : (E,) float edge weights
    x          : (N, B, H)   current node state
    dx_dt_raw  : (B, N, Din) == funcx(t)
    """
    d_param, w_param, lin_params = pparams
    N, T, B, H = graph["state"].shape
    Din = dx_dt_raw.shape[-1]

    ra, ba, rc, bcp, rb, bb, Hp = fuse_params(d_param, w_param, lin_params)

    # g.ndata['state'][:, int(t / step_size)] = x
    t_idx = int(t / step_size)
    state = graph["state"].at[:, t_idx].set(x)

    # message passing: catch = (t + delay)/step_size, clipped (before the cast)
    # to [0, T-1]; fused gather -> (E, B, H) with no (E, T, B, H) intermediate.
    catch = (t + graph["delay"]) / step_size
    catch = jnp.clip(catch, 0.0, float(T - 1)).astype(jnp.int32)
    choose = state[graph["src"], catch]                       # (E, B, H)
    m = graph["w"][:, None, None] * choose
    s = jnp.zeros((N, B, H), jnp.float32).at[graph["dst"]].add(m)
    # TODO(synk): DGL update_all gather/scatter kept as JAX glue (irregular).

    # dense hot path in Pallas, rows = N*B (lane-padded to Hp, bf16 streamed)
    dx_dt = jnp.transpose(dx_dt_raw, (1, 0, 2))               # .permute(1,0,2)
    M = N * B
    padc = Hp - H
    s2 = jnp.pad(s.reshape(M, H), ((0, 0), (0, padc))).astype(jnp.bfloat16)
    x2 = jnp.pad(x.reshape(M, H), ((0, 0), (0, padc))).astype(jnp.bfloat16)
    dx2 = dx_dt.reshape(M, Din).astype(jnp.bfloat16)

    out = dde_dense(s2, dx2, x2, ra, ba, rc, bcp, rb, bb)     # (M, Hp)
    return out[:, :H].reshape(N, B, H)


# pure-JAX unfused f32 reference (mirrors DDEFunc.forward math exactly)
def dense_ref(s, x, dx, d_param, w_param, lin_params):
    wg, bg, wc, bc, wty, bty, wgo, bgo = lin_params
    d = jnp.clip(d_param, 0.0, 1.0)
    w_eff = (w_param * d[None, :]) @ w_param.T
    y1 = s @ w_eff
    gate = jax.nn.sigmoid(y1 @ wg + bg)
    y2 = (1.0 - gate) * (y1 - x)
    y3 = y2 * (dx @ wc + bc)
    y4 = jnp.maximum(y3, 0.0) @ wty + bty
    return jax.nn.sigmoid(y4 @ wgo + bgo) * y4


# --------------------------------- main -------------------------------------
if __name__ == "__main__":
    key = jax.random.PRNGKey(0)
    N, B, H, Din, T, E = 8, 4, 32, 8, 8, 24
    step_size = 1.0
    t = 4.0

    ks = jax.random.split(key, 20)

    # DDEFunc parameters (synthetic; linear weights already in x @ W layout)
    d_param = jax.random.uniform(ks[0], (H,), jnp.float32, 0.0, 1.0)
    w_param = (jnp.eye(H, dtype=jnp.float32)
               + 0.05 * jax.random.normal(ks[1], (H, H), jnp.float32))
    wg  = jax.random.normal(ks[2], (H, H), jnp.float32) * 0.1    # gate
    bg  = jax.random.normal(ks[3], (1, H), jnp.float32) * 0.1
    wc  = jax.random.normal(ks[4], (Din, H), jnp.float32) * 0.1  # trans_control
    bc  = jax.random.normal(ks[5], (1, H), jnp.float32) * 0.1
    wty = jax.random.normal(ks[6], (H, H), jnp.float32) * 0.1    # trans_y
    bty = jax.random.normal(ks[7], (1, H), jnp.float32) * 0.1
    wgo = jax.random.normal(ks[8], (H, H), jnp.float32) * 0.1    # gate_out
    bgo = jax.random.normal(ks[9], (1, H), jnp.float32) * 0.1
    lin_params = (wg, bg, wc, bc, wty, bty, wgo, bgo)

    # synthetic graph data (replaces the DGL graph)
    graph = {
        "state": jax.random.normal(ks[10], (N, T, B, H), jnp.float32),
        "src":   jax.random.randint(ks[11], (E,), 0, N, jnp.int32),
        "dst":   jax.random.randint(ks[12], (E,), 0, N, jnp.int32),
        "delay": jax.random.uniform(ks[13], (E,), jnp.float32, -4.0, 2.0),
        "w":     jax.random.normal(ks[14], (E,), jnp.float32),
    }

    x = jax.random.normal(ks[15], (N, B, H), jnp.float32)
    dx_dt_raw = jax.random.normal(ks[16], (B, N, Din), jnp.float32)  # funcx(t)

    pparams = (d_param, w_param, lin_params)
    out = jax.block_until_ready(
        dde_forward(graph, x, dx_dt_raw, t, step_size, pparams))
    assert out.shape == (N, B, H)

    # correctness: rebuild aggregated message s, run unfused f32 reference.
    # (kernel uses bf16 matmul operands + approx reciprocal -> bf16 tolerance)
    t_idx = int(t / step_size)
    state = graph["state"].at[:, t_idx].set(x)
    catch = jnp.clip((t + graph["delay"]) / step_size, 0.0,
                     float(T - 1)).astype(jnp.int32)
    choose = state[graph["src"], catch]
    s = jnp.zeros((N, B, H), jnp.float32).at[graph["dst"]].add(
        graph["w"][:, None, None] * choose)
    ref = dense_ref(s.reshape(N * B, H), x.reshape(N * B, H),
                    jnp.transpose(dx_dt_raw, (1, 0, 2)).reshape(N * B, Din),
                    d_param, w_param, lin_params).reshape(N, B, H)
    err = float(jnp.max(jnp.abs(out - ref)))
    rel = float(jnp.linalg.norm(out - ref) / (jnp.linalg.norm(ref) + 1e-12))
    assert err < 1e-1 and rel < 5e-2, (err, rel)

    print("KERNEL_OK")
</pallas_src>

<mosaic_0001>
module attributes {stable_mosaic.version = 11 : i64} {
  func.func @dde_kernel(%arg0: i32, %arg1: memref<16x128xbf16, #tpu.memory_space<vmem>>, %arg2: memref<16x8xbf16, #tpu.memory_space<vmem>>, %arg3: memref<16x128xbf16, #tpu.memory_space<vmem>>, %arg4: memref<128x256xbf16, #tpu.memory_space<vmem>>, %arg5: memref<1x256xf32, #tpu.memory_space<vmem>>, %arg6: memref<8x128xbf16, #tpu.memory_space<vmem>>, %arg7: memref<1x128xf32, #tpu.memory_space<vmem>>, %arg8: memref<128x256xbf16, #tpu.memory_space<vmem>>, %arg9: memref<1x256xf32, #tpu.memory_space<vmem>>, %arg10: memref<16x128xf32, #tpu.memory_space<vmem>>) attributes {dimension_semantics = [#tpu.dimension_semantics<parallel>], iteration_bounds = array<i64: 2>, scalar_prefetch = 0 : i64, scratch_operands = 0 : i64, tpu.core_type = #tpu.core_type<tc>, window_params = [{transform_indices = @transform_0, window_bounds = array<i64: 16, 128>}, {transform_indices = @transform_1, window_bounds = array<i64: 16, 8>}, {transform_indices = @transform_2, window_bounds = array<i64: 16, 128>}, {pipeline_mode = #tpu.pipeline_mode<synchronous>, transform_indices = @transform_3, window_bounds = array<i64: 128, 256>}, {pipeline_mode = #tpu.pipeline_mode<synchronous>, transform_indices = @transform_4, window_bounds = array<i64: 1, 256>}, {pipeline_mode = #tpu.pipeline_mode<synchronous>, transform_indices = @transform_5, window_bounds = array<i64: 8, 128>}, {pipeline_mode = #tpu.pipeline_mode<synchronous>, transform_indices = @transform_6, window_bounds = array<i64: 1, 128>}, {pipeline_mode = #tpu.pipeline_mode<synchronous>, transform_indices = @transform_7, window_bounds = array<i64: 128, 256>}, {pipeline_mode = #tpu.pipeline_mode<synchronous>, transform_indices = @transform_8, window_bounds = array<i64: 1, 256>}, {transform_indices = @transform_9, window_bounds = array<i64: 16, 128>}]} {
    %c0 = arith.constant 0 : index
    %c0_0 = arith.constant 0 : index
    %0 = vector.load %arg1[%c0, %c0_0] : memref<16x128xbf16, #tpu.memory_space<vmem>>, vector<16x128xbf16>
    %c0_1 = arith.constant 0 : index
    %c0_2 = arith.constant 0 : index
    %1 = vector.load %arg2[%c0_1, %c0_2] : memref<16x8xbf16, #tpu.memory_space<vmem>>, vector<16x8xbf16>
    %c0_3 = arith.constant 0 : index
    %c0_4 = arith.constant 0 : index
    %2 = vector.load %arg3[%c0_3, %c0_4] : memref<16x128xbf16, #tpu.memory_space<vmem>>, vector<16x128xbf16>
    %3 = arith.extf %2 : vector<16x128xbf16> to vector<16x128xf32>
    %c0_5 = arith.constant 0 : index
    %c0_6 = arith.constant 0 : index
    %4 = vector.load %arg4[%c0_5, %c0_6] : memref<128x256xbf16, #tpu.memory_space<vmem>>, vector<128x256xbf16>
    %cst = arith.constant dense<0.000000e+00> : vector<16x256xf32>
    %5 = tpu.matmul %0, %4, %cst {dimension_numbers = #tpu.dot_dimension_numbers<[1], [0], [0], [1], [0, 0, 1, 1], [], []>} : vector<16x128xbf16>, vector<128x256xbf16>, vector<16x256xf32> -> vector<16x256xf32>
    %c0_7 = arith.constant 0 : index
    %c0_8 = arith.constant 0 : index
    %6 = vector.load %arg5[%c0_7, %c0_8] : memref<1x256xf32, #tpu.memory_space<vmem>>, vector<1x256xf32>
    %7 = vector.broadcast %6 : vector<1x256xf32> to vector<16x256xf32>
    %8 = arith.addf %5, %7 : vector<16x256xf32>
    %9 = vector.extract_strided_slice %8 {offsets = [0, 0], sizes = [16, 128], strides = [1, 1]} : vector<16x256xf32> to vector<16x128xf32>
    %10 = vector.extract_strided_slice %8 {offsets = [0, 128], sizes = [16, 128], strides = [1, 1]} : vector<16x256xf32> to vector<16x128xf32>
    %cst_9 = arith.constant 0.000000e+00 : f32
    %11 = vector.broadcast %cst_9 : f32 to vector<16x128xf32>
    %12 = arith.subf %11, %10 : vector<16x128xf32>
    %13 = math.exp %12 : vector<16x128xf32>
    %cst_10 = arith.constant 1.000000e+00 : f32
    %14 = vector.broadcast %cst_10 : f32 to vector<16x128xf32>
    %15 = arith.addf %14, %13 : vector<16x128xf32>
    %16 = tpu.reciprocal %15 {approx = true} : vector<16x128xf32> -> vector<16x128xf32>
    %c0_11 = arith.constant 0 : index
    %c0_12 = arith.constant 0 : index
    %17 = vector.load %arg6[%c0_11, %c0_12] : memref<8x128xbf16, #tpu.memory_space<vmem>>, vector<8x128xbf16>
    %cst_13 = arith.constant dense<0.000000e+00> : vector<16x128xf32>
    %18 = tpu.matmul %1, %17, %cst_13 {dimension_numbers = #tpu.dot_dimension_numbers<[1], [0], [0], [1], [0, 0, 1, 1], [], []>} : vector<16x8xbf16>, vector<8x128xbf16>, vector<16x128xf32> -> vector<16x128xf32>
    %c0_14 = arith.constant 0 : index
    %c0_15 = arith.constant 0 : index
    %19 = vector.load %arg7[%c0_14, %c0_15] : memref<1x128xf32, #tpu.memory_space<vmem>>, vector<1x128xf32>
    %20 = vector.broadcast %19 : vector<1x128xf32> to vector<16x128xf32>
    %21 = arith.addf %18, %20 : vector<16x128xf32>
    %cst_16 = arith.constant 1.000000e+00 : f32
    %22 = vector.broadcast %cst_16 : f32 to vector<16x128xf32>
    %23 = arith.subf %22, %16 : vector<16x128xf32>
    %24 = arith.subf %9, %3 : vector<16x128xf32>
    %25 = arith.mulf %23, %24 : vector<16x128xf32>
    %26 = arith.mulf %25, %21 : vector<16x128xf32>
    %cst_17 = arith.constant 0.000000e+00 : f32
    %27 = vector.broadcast %cst_17 : f32 to vector<16x128xf32>
    %28 = arith.maximumf %26, %27 : vector<16x128xf32>
    %29 = arith.truncf %28 : vector<16x128xf32> to vector<16x128xbf16>
    %c0_18 = arith.constant 0 : index
    %c0_19 = arith.constant 0 : index
    %30 = vector.load %arg8[%c0_18, %c0_19] : memref<128x256xbf16, #tpu.memory_space<vmem>>, vector<128x256xbf16>
    %cst_20 = arith.constant dense<0.000000e+00> : vector<16x256xf32>
    %31 = tpu.matmul %29, %30, %cst_20 {dimension_numbers = #tpu.dot_dimension_numbers<[1], [0], [0], [1], [0, 0, 1, 1], [], []>} : vector<16x128xbf16>, vector<128x256xbf16>, vector<16x256xf32> -> vector<16x256xf32>
    %c0_21 = arith.constant 0 : index
    %c0_22 = arith.constant 0 : index
    %32 = vector.load %arg9[%c0_21, %c0_22] : memref<1x256xf32, #tpu.memory_space<vmem>>, vector<1x256xf32>
    %33 = vector.broadcast %32 : vector<1x256xf32> to vector<16x256xf32>
    %34 = arith.addf %31, %33 : vector<16x256xf32>
    %35 = vector.extract_strided_slice %34 {offsets = [0, 0], sizes = [16, 128], strides = [1, 1]} : vector<16x256xf32> to vector<16x128xf32>
    %36 = vector.extract_strided_slice %34 {offsets = [0, 128], sizes = [16, 128], strides = [1, 1]} : vector<16x256xf32> to vector<16x128xf32>
    %cst_23 = arith.constant 0.000000e+00 : f32
    %37 = vector.broadcast %cst_23 : f32 to vector<16x128xf32>
    %38 = arith.subf %37, %36 : vector<16x128xf32>
    %39 = math.exp %38 : vector<16x128xf32>
    %cst_24 = arith.constant 1.000000e+00 : f32
    %40 = vector.broadcast %cst_24 : f32 to vector<16x128xf32>
    %41 = arith.addf %40, %39 : vector<16x128xf32>
    %42 = tpu.reciprocal %41 {approx = true} : vector<16x128xf32> -> vector<16x128xf32>
    %43 = arith.mulf %42, %35 : vector<16x128xf32>
    %c0_25 = arith.constant 0 : index
    %c0_26 = arith.constant 0 : index
    %44 = vector.load %arg10[%c0_25, %c0_26] : memref<16x128xf32, #tpu.memory_space<vmem>>, vector<16x128xf32>
    tpu.vector_store %arg10[%c0_25, %c0_26], %43 {strides = array<i32>} : memref<16x128xf32, #tpu.memory_space<vmem>>, vector<16x128xf32>,
    return
  }
  func.func @transform_0(%arg0: i32) -> (i32, i32) {
    %c0_i32 = arith.constant 0 : i32
    %c0_i32_0 = arith.constant 0 : i32
    return %arg0, %c0_i32 : i32, i32
  }
  func.func @transform_1(%arg0: i32) -> (i32, i32) {
    %c0_i32 = arith.constant 0 : i32
    %c0_i32_0 = arith.constant 0 : i32
    return %arg0, %c0_i32 : i32, i32
  }
  func.func @transform_2(%arg0: i32) -> (i32, i32) {
    %c0_i32 = arith.constant 0 : i32
    %c0_i32_0 = arith.constant 0 : i32
    return %arg0, %c0_i32 : i32, i32
  }
  func.func @transform_3(%arg0: i32) -> (i32, i32) {
    %c0_i32 = arith.constant 0 : i32
    %c0_i32_0 = arith.constant 0 : i32
    %c0_i32_1 = arith.constant 0 : i32
    return %c0_i32, %c0_i32_0 : i32, i32
  }
  func.func @transform_4(%arg0: i32) -> (i32, i32) {
    %c0_i32 = arith.constant 0 : i32
    %c0_i32_0 = arith.constant 0 : i32
    %c0_i32_1 = arith.constant 0 : i32
    return %c0_i32, %c0_i32_0 : i32, i32
  }
  func.func @transform_5(%arg0: i32) -> (i32, i32) {
    %c0_i32 = arith.constant 0 : i32
    %c0_i32_0 = arith.constant 0 : i32
    %c0_i32_1 = arith.constant 0 : i32
    return %c0_i32, %c0_i32_0 : i32, i32
  }
  func.func @transform_6(%arg0: i32) -> (i32, i32) {
    %c0_i32 = arith.constant 0 : i32
    %c0_i32_0 = arith.constant 0 : i32
    %c0_i32_1 = arith.constant 0 : i32
    return %c0_i32, %c0_i32_0 : i32, i32
  }
  func.func @transform_7(%arg0: i32) -> (i32, i32) {
    %c0_i32 = arith.constant 0 : i32
    %c0_i32_0 = arith.constant 0 : i32
    %c0_i32_1 = arith.constant 0 : i32
    return %c0_i32, %c0_i32_0 : i32, i32
  }
  func.func @transform_8(%arg0: i32) -> (i32, i32) {
    %c0_i32 = arith.constant 0 : i32
    %c0_i32_0 = arith.constant 0 : i32
    %c0_i32_1 = arith.constant 0 : i32
    return %c0_i32, %c0_i32_0 : i32, i32
  }
  func.func @transform_9(%arg0: i32) -> (i32, i32) {
    %c0_i32 = arith.constant 0 : i32
    %c0_i32_0 = arith.constant 0 : i32
    return %arg0, %c0_i32 : i32, i32
  }
}

module attributes {stable_mosaic.version = 11 : i64} {
  func.func @dde_kernel(%arg0: i32, %arg1: memref<16x128xbf16, #tpu.memory_space<vmem>>, %arg2: memref<16x8xbf16, #tpu.memory_space<vmem>>, %arg3: memref<16x128xbf16, #tpu.memory_space<vmem>>, %arg4: memref<128x256xbf16, #tpu.memory_space<vmem>>, %arg5: memref<1x256xf32, #tpu.memory_space<vmem>>, %arg6: memref<8x128xbf16, #tpu.memory_space<vmem>>, %arg7: memref<1x128xf32, #tpu.memory_space<vmem>>, %arg8: memref<128x256xbf16, #tpu.memory_space<vmem>>, %arg9: memref<1x256xf32, #tpu.memory_space<vmem>>, %arg10: memref<16x128xf32, #tpu.memory_space<vmem>>) attributes {dimension_semantics = [#tpu.dimension_semantics<parallel>], iteration_bounds = array<i64: 2>, scalar_prefetch = 0 : i64, scratch_operands = 0 : i64, tpu.core_type = #tpu.core_type<tc>, window_params = [{transform_indices = @transform_0, window_bounds = array<i64: 16, 128>}, {transform_indices = @transform_1, window_bounds = array<i64: 16, 8>}, {transform_indices = @transform_2, window_bounds = array<i64: 16, 128>}, {pipeline_mode = #tpu.pipeline_mode<synchronous>, transform_indices = @transform_3, window_bounds = array<i64: 128, 256>}, {pipeline_mode = #tpu.pipeline_mode<synchronous>, transform_indices = @transform_4, window_bounds = array<i64: 1, 256>}, {pipeline_mode = #tpu.pipeline_mode<synchronous>, transform_indices = @transform_5, window_bounds = array<i64: 8, 128>}, {pipeline_mode = #tpu.pipeline_mode<synchronous>, transform_indices = @transform_6, window_bounds = array<i64: 1, 128>}, {pipeline_mode = #tpu.pipeline_mode<synchronous>, transform_indices = @transform_7, window_bounds = array<i64: 128, 256>}, {pipeline_mode = #tpu.pipeline_mode<synchronous>, transform_indices = @transform_8, window_bounds = array<i64: 1, 256>}, {transform_indices = @transform_9, window_bounds = array<i64: 16, 128>}]} {
    %c0 = arith.constant 0 : index
    %c0_0 = arith.constant 0 : index
    %0 = vector.load %arg1[%c0, %c0_0] : memref<16x128xbf16, #tpu.memory_space<vmem>>, vector<16x128xbf16>
    %c0_1 = arith.constant 0 : index
    %c0_2 = arith.constant 0 : index
    %1 = vector.load %arg2[%c0_1, %c0_2] : memref<16x8xbf16, #tpu.memory_space<vmem>>, vector<16x8xbf16>
    %c0_3 = arith.constant 0 : index
    %c0_4 = arith.constant 0 : index
    %2 = vector.load %arg3[%c0_3, %c0_4] : memref<16x128xbf16, #tpu.memory_space<vmem>>, vector<16x128xbf16>
    %3 = arith.extf %2 : vector<16x128xbf16> to vector<16x128xf32>
    %c0_5 = arith.constant 0 : index
    %c0_6 = arith.constant 0 : index
    %4 = vector.load %arg4[%c0_5, %c0_6] : memref<128x256xbf16, #tpu.memory_space<vmem>>, vector<128x256xbf16>
    %cst = arith.constant dense<0.000000e+00> : vector<16x256xf32>
    %5 = tpu.matmul %0, %4, %cst {dimension_numbers = #tpu.dot_dimension_numbers<[1], [0], [0], [1], [0, 0, 1, 1], [], []>} : vector<16x128xbf16>, vector<128x256xbf16>, vector<16x256xf32> -> vector<16x256xf32>
    %c0_7 = arith.constant 0 : index
    %c0_8 = arith.constant 0 : index
    %6 = vector.load %arg5[%c0_7, %c0_8] : memref<1x256xf32, #tpu.memory_space<vmem>>, vector<1x256xf32>
    %7 = vector.broadcast %6 : vector<1x256xf32> to vector<16x256xf32>
    %8 = arith.addf %5, %7 : vector<16x256xf32>
    %9 = vector.extract_strided_slice %8 {offsets = [0, 0], sizes = [16, 128], strides = [1, 1]} : vector<16x256xf32> to vector<16x128xf32>
    %10 = vector.extract_strided_slice %8 {offsets = [0, 128], sizes = [16, 128], strides = [1, 1]} : vector<16x256xf32> to vector<16x128xf32>
    %cst_9 = arith.constant 0.000000e+00 : f32
    %11 = vector.broadcast %cst_9 : f32 to vector<16x128xf32>
    %12 = arith.subf %11, %10 : vector<16x128xf32>
    %13 = math.exp %12 : vector<16x128xf32>
    %cst_10 = arith.constant 1.000000e+00 : f32
    %14 = vector.broadcast %cst_10 : f32 to vector<16x128xf32>
    %15 = arith.addf %14, %13 : vector<16x128xf32>
    %16 = tpu.reciprocal %15 {approx = true} : vector<16x128xf32> -> vector<16x128xf32>
    %c0_11 = arith.constant 0 : index
    %c0_12 = arith.constant 0 : index
    %17 = vector.load %arg6[%c0_11, %c0_12] : memref<8x128xbf16, #tpu.memory_space<vmem>>, vector<8x128xbf16>
    %cst_13 = arith.constant dense<0.000000e+00> : vector<16x128xf32>
    %18 = tpu.matmul %1, %17, %cst_13 {dimension_numbers = #tpu.dot_dimension_numbers<[1], [0], [0], [1], [0, 0, 1, 1], [], []>} : vector<16x8xbf16>, vector<8x128xbf16>, vector<16x128xf32> -> vector<16x128xf32>
    %c0_14 = arith.constant 0 : index
    %c0_15 = arith.constant 0 : index
    %19 = vector.load %arg7[%c0_14, %c0_15] : memref<1x128xf32, #tpu.memory_space<vmem>>, vector<1x128xf32>
    %20 = vector.broadcast %19 : vector<1x128xf32> to vector<16x128xf32>
    %21 = arith.addf %18, %20 : vector<16x128xf32>
    %cst_16 = arith.constant 1.000000e+00 : f32
    %22 = vector.broadcast %cst_16 : f32 to vector<16x128xf32>
    %23 = arith.subf %22, %16 : vector<16x128xf32>
    %24 = arith.subf %9, %3 : vector<16x128xf32>
    %25 = arith.mulf %23, %24 : vector<16x128xf32>
    %26 = arith.mulf %25, %21 : vector<16x128xf32>
    %cst_17 = arith.constant 0.000000e+00 : f32
    %27 = vector.broadcast %cst_17 : f32 to vector<16x128xf32>
    %28 = arith.maximumf %26, %27 : vector<16x128xf32>
    %29 = arith.truncf %28 : vector<16x128xf32> to vector<16x128xbf16>
    %c0_18 = arith.constant 0 : index
    %c0_19 = arith.constant 0 : index
    %30 = vector.load %arg8[%c0_18, %c0_19] : memref<128x256xbf16, #tpu.memory_space<vmem>>, vector<128x256xbf16>
    %cst_20 = arith.constant dense<0.000000e+00> : vector<16x256xf32>
    %31 = tpu.matmul %29, %30, %cst_20 {dimension_numbers = #tpu.dot_dimension_numbers<[1], [0], [0], [1], [0, 0, 1, 1], [], []>} : vector<16x128xbf16>, vector<128x256xbf16>, vector<16x256xf32> -> vector<16x256xf32>
    %c0_21 = arith.constant 0 : index
    %c0_22 = arith.constant 0 : index
    %32 = vector.load %arg9[%c0_21, %c0_22] : memref<1x256xf32, #tpu.memory_space<vmem>>, vector<1x256xf32>
    %33 = vector.broadcast %32 : vector<1x256xf32> to vector<16x256xf32>
    %34 = arith.addf %31, %33 : vector<16x256xf32>
    %35 = vector.extract_strided_slice %34 {offsets = [0, 0], sizes = [16, 128], strides = [1, 1]} : vector<16x256xf32> to vector<16x128xf32>
    %36 = vector.extract_strided_slice %34 {offsets = [0, 128], sizes = [16, 128], strides = [1, 1]} : vector<16x256xf32> to vector<16x128xf32>
    %cst_23 = arith.constant 0.000000e+00 : f32
    %37 = vector.broadcast %cst_23 : f32 to vector<16x128xf32>
    %38 = arith.subf %37, %36 : vector<16x128xf32>
    %39 = math.exp %38 : vector<16x128xf32>
    %cst_24 = arith.constant 1.000000e+00 : f32
    %40 = vector.broadcast %cst_24 : f32 to vector<16x128xf32>
    %41 = arith.addf %40, %39 : vector<16x128xf32>
    %42 = tpu.reciprocal %41 {approx = true} : vector<16x128xf32> -> vector<16x128xf32>
    %43 = arith.mulf %42, %35 : vector<16x128xf32>
    %c0_25 = arith.constant 0 : index
    %c0_26 = arith.constant 0 : index
    %44 = vector.load %arg10[%c0_25, %c0_26] : memref<16x128xf32, #tpu.memory_space<vmem>>, vector<16x128xf32>
    tpu.vector_store %arg10[%c0_25, %c0_26], %43 {strides = array<i32>} : memref<16x128xf32, #tpu.memory_space<vmem>>, vector<16x128xf32>,
    return
  }
  func.func @transform_0(%arg0: i32) -> (i32, i32) {
    %c0_i32 = arith.constant 0 : i32
    %c0_i32_0 = arith.constant 0 : i32
    return %arg0, %c0_i32 : i32, i32
  }
  func.func @transform_1(%arg0: i32) -> (i32, i32) {
    %c0_i32 = arith.constant 0 : i32
    %c0_i32_0 = arith.constant 0 : i32
    return %arg0, %c0_i32 : i32, i32
  }
  func.func @transform_2(%arg0: i32) -> (i32, i32) {
    %c0_i32 = arith.constant 0 : i32
    %c0_i32_0 = arith.constant 0 : i32
    return %arg0, %c0_i32 : i32, i32
  }
  func.func @transform_3(%arg0: i32) -> (i32, i32) {
    %c0_i32 = arith.constant 0 : i32
    %c0_i32_0 = arith.constant 0 : i32
    %c0_i32_1 = arith.constant 0 : i32
    return %c0_i32, %c0_i32_0 : i32, i32
  }
  func.func @transform_4(%arg0: i32) -> (i32, i32) {
    %c0_i32 = arith.constant 0 : i32
    %c0_i32_0 = arith.constant 0 : i32
    %c0_i32_1 = arith.constant 0 : i32
    return %c0_i32, %c0_i32_0 : i32, i32
  }
  func.func @transform_5(%arg0: i32) -> (i32, i32) {
    %c0_i32 = arith.constant 0 : i32
    %c0_i32_0 = arith.constant 0 : i32
    %c0_i32_1 = arith.constant 0 : i32
    return %c0_i32, %c0_i32_0 : i32, i32
  }
  func.func @transform_6(%arg0: i32) -> (i32, i32) {
    %c0_i32 = arith.constant 0 : i32
    %c0_i32_0 = arith.constant 0 : i32
    %c0_i32_1 = arith.constant 0 : i32
    return %c0_i32, %c0_i32_0 : i32, i32
  }
  func.func @transform_7(%arg0: i32) -> (i32, i32) {
    %c0_i32 = arith.constant 0 : i32
    %c0_i32_0 = arith.constant 0 : i32
    %c0_i32_1 = arith.constant 0 : i32
    return %c0_i32, %c0_i32_0 : i32, i32
  }
  func.func @transform_8(%arg0: i32) -> (i32, i32) {
    %c0_i32 = arith.constant 0 : i32
    %c0_i32_0 = arith.constant 0 : i32
    %c0_i32_1 = arith.constant 0 : i32
    return %c0_i32, %c0_i32_0 : i32, i32
  }
  func.func @transform_9(%arg0: i32) -> (i32, i32) {
    %c0_i32 = arith.constant 0 : i32
    %c0_i32_0 = arith.constant 0 : i32
    return %arg0, %c0_i32 : i32, i32
  }
}

</mosaic_0001>

<llo_original>
// kernel: tpu_custom_call.1
$region0: #{tpu_custom_call.1}
  #allocation0 [shape = 'u32[]', space=smem, size = 0x4, offset = 0x4, fixed_abs, tag = 'smem constant byte address 0x4 - core index']
  #allocation1 [shape = 'u32[144,128]{1,0:T(1,128)}', space=vmem, size = 0x12000, scoped, tag = 'internal scratch']
  %s0 = inlined_call_operand.vmem [shape: bf16[32,128], index: 0, kind: input, shape index: {}]
  %s1 = inlined_call_operand.vmem [shape: bf16[32,8], index: 1, kind: input, shape index: {}]
  %s2 = inlined_call_operand.hbm [shape: bf16[32,128], index: 2, kind: input, shape index: {}]
  %s3 = inlined_call_operand.hbm [shape: bf16[128,256], index: 3, kind: input, shape index: {}]
  %s4 = inlined_call_operand.vmem [shape: f32[1,256], index: 4, kind: input, shape index: {}]
  %s5 = inlined_call_operand.vmem [shape: bf16[8,128], index: 5, kind: input, shape index: {}]
  %s6 = inlined_call_operand.vmem [shape: f32[1,128], index: 6, kind: input, shape index: {}]
  %s7 = inlined_call_operand.hbm [shape: bf16[128,256], index: 7, kind: input, shape index: {}]
  %s8 = inlined_call_operand.vmem [shape: f32[1,256], index: 8, kind: input, shape index: {}]
  %s9 = inlined_call_operand.hbm [shape: f32[32,128], index: 9, kind: output, shape index: {}]
  %s10 = sld [smem:[#allocation0]]
  $region81: #{tpu_custom_call.1} parent=0
    _
  %s12 = ssub.s32 1, %s10
  %s13 = scalar_select 0, %s12, %s10
  $region1: #{tpu_custom_call.1} parent=0
    #allocation2 [shape = 'u8[8192]{0}', space=vmem, size = 0x2000, scoped, tag = 'input window, operand 2']
    #allocation3 [shape = 's32[2]{0}', space=sflag, size = 0x8, scoped, tag = 'scoped memory for tpu_custom_call.1']
    #allocation4 [shape = 's32[2]{0}', space=sflag, size = 0x8, scoped, tag = 'scoped memory for tpu_custom_call.1']
    #allocation5 [shape = 'u8[65536]{0}', space=vmem, size = 0x10000, scoped, tag = 'input window, operand 3, single buffered']
    #allocation6 [shape = 's32[1]{0}', space=sflag, size = 0x4, scoped, tag = 'scoped memory for tpu_custom_call.1']
    #allocation7 [shape = 'u8[65536]{0}', space=vmem, size = 0x10000, scoped, tag = 'input window, operand 7, single buffered']
    #allocation8 [shape = 'u8[16384]{0}', space=vmem, size = 0x4000, scoped, tag = 'output window, operand 0']
    %14 = vsyncpa [#allocation3], 0
    %s15 = scalar_lea.sflag [#allocation3], 1
    %16 = vsyncpa %s15, 0
    %17 = vsyncpa [#allocation6], 0
    %18 = vsyncpa [#allocation4], 0
    %s19 = scalar_lea.sflag [#allocation4], 1
    %20 = vsyncpa %s19, 0
    loop: start=0, step=1, limit=4
    $region2: #{tpu_custom_call.1} parent=1 // loop_pre_header
      _
    $region3: #{tpu_custom_call.1} parent=1 // loop_header
      %s22 = sphi 0, %s26
      %p23 = scmp.ge.s32.totalorder %s22, 4
      %s32 = sphi 0, %s34
      %s35 = sphi 0, %s32
      %s36 = sphi 0, %s35
      %s52 = sphi 0, %s36
      %s58 = sphi 0, %s60
      %s61 = sphi 0, %s58
      %s62 = sphi 0, %s61
      %s78 = sphi 0, %s62
      %s84 = sphi 0, %s86
      %s87 = sphi 0, %s84
      %s88 = sphi 0, %s87
      %s104 = sphi 0, %s88
      %s108 = sphi 0, %s108
      %s110 = sphi 0, %s108
      %s111 = sphi 0, %s110
      %s125 = sphi 0, %s111
      %s129 = sphi 0, %s129
      %s131 = sphi 0, %s129
      %s132 = sphi 0, %s131
      %s146 = sphi 0, %s132
      %s150 = sphi 0, %s150
      %s152 = sphi 0, %s150
      %s153 = sphi 0, %s152
      %s167 = sphi 0, %s153
      %s171 = sphi 0, %s171
      %s173 = sphi 0, %s171
      %s174 = sphi 0, %s173
      %s188 = sphi 0, %s174
      %s192 = sphi 0, %s192
      %s194 = sphi 0, %s192
      %s195 = sphi 0, %s194
      %s209 = sphi 0, %s195
      %s213 = sphi 0, %s213
      %s215 = sphi 0, %s213
      %s216 = sphi 0, %s215
      %s230 = sphi 0, %s216
      %s236 = sphi 0, %s238
      %s239 = sphi 0, %s236
      %s240 = sphi 0, %s239
      %s256 = sphi 0, %s240
    $region4: #{tpu_custom_call.1} parent=1 // loop_header_branch
      %25 = sbr.rel (%p23) target = $region8
    $region5: #{tpu_custom_call.1} parent=1 // loop_body
      %s27 = ssub.s32 %s22, 1
      %s28 = ssub.s32 %s22, 2
      %s29 = sadd.s32 %s22, 1
      %s30 = ssub.s32 %s22, %s29
      %p31 = scmp.eq.s32.totalorder %s30, 0
      %s33 = sadd.s32 %s32, 1
      %s34 = scalar_select %p31, %s32, %s33
      %p37 = pneg %p31
      %p38 = scmp.eq.s32.totalorder %s22, 1
      %p39 = por %p37, %p38
      %p40 = scmp.ne.s32.totalorder %s32, %s35
      %p41 = scmp.eq.s32.totalorder %s22, 0
      %p42 = por %p40, %p41
      %p43 = scmp.ne.s32.totalorder %s32, %s35
      %p44 = scmp.eq.s32.totalorder %s27, 1
      %p45 = por %p43, %p44
      %p46 = scmp.ne.s32.totalorder %s35, %s36
      %p47 = scmp.eq.s32.totalorder %s27, 0
      %p48 = por %p46, %p47
      %p49 = scmp.ne.s32.totalorder %s35, %s36
      %p50 = scmp.eq.s32.totalorder %s28, 1
      %p51 = por %p49, %p50
      %p53 = scmp.ne.s32.totalorder %s36, %s52
      %p54 = scmp.eq.s32.totalorder %s28, 0
      %p55 = por %p53, %p54
      %s56 = ssub.s32 %s22, %s29
      %p57 = scmp.eq.s32.totalorder %s56, 0
      %s59 = sadd.s32 %s58, 1
      %s60 = scalar_select %p57, %s58, %s59
      %p63 = pneg %p57
      %p64 = scmp.eq.s32.totalorder %s22, 1
      %p65 = por %p63, %p64
      %p66 = scmp.ne.s32.totalorder %s58, %s61
      %p67 = scmp.eq.s32.totalorder %s22, 0
      %p68 = por %p66, %p67
      %p69 = scmp.ne.s32.totalorder %s58, %s61
      %p70 = scmp.eq.s32.totalorder %s27, 1
      %p71 = por %p69, %p70
      %p72 = scmp.ne.s32.totalorder %s61, %s62
      %p73 = scmp.eq.s32.totalorder %s27, 0
      %p74 = por %p72, %p73
      %p75 = scmp.ne.s32.totalorder %s61, %s62
      %p76 = scmp.eq.s32.totalorder %s28, 1
      %p77 = por %p75, %p76
      %p79 = scmp.ne.s32.totalorder %s62, %s78
      %p80 = scmp.eq.s32.totalorder %s28, 0
      %p81 = por %p79, %p80
      %s82 = ssub.s32 %s22, %s29
      %p83 = scmp.eq.s32.totalorder %s82, 0
      %s85 = sadd.s32 %s84, 1
      %s86 = scalar_select %p83, %s84, %s85
      %p89 = pneg %p83
      %p90 = scmp.eq.s32.totalorder %s22, 1
      %p91 = por %p89, %p90
      %p92 = scmp.ne.s32.totalorder %s84, %s87
      %p93 = scmp.eq.s32.totalorder %s22, 0
      %p94 = por %p92, %p93
      %p95 = scmp.ne.s32.totalorder %s84, %s87
      %p96 = scmp.eq.s32.totalorder %s27, 1
      %p97 = por %p95, %p96
      %p98 = scmp.ne.s32.totalorder %s87, %s88
      %p99 = scmp.eq.s32.totalorder %s27, 0
      %p100 = por %p98, %p99
      %p101 = scmp.ne.s32.totalorder %s87, %s88
      %p102 = scmp.eq.s32.totalorder %s28, 1
      %p103 = por %p101, %p102
      %p105 = scmp.ne.s32.totalorder %s88, %s104
      %p106 = scmp.eq.s32.totalorder %s28, 0
      %p107 = por %p105, %p106
      %s109 = sadd.s32 %s108, 1
      %p112 = scmp.eq.s32.totalorder %s22, 1
      %p113 = scmp.ne.s32.totalorder %s108, %s110
      %p114 = scmp.eq.s32.totalorder %s22, 0
      %p115 = por %p113, %p114
      %p116 = scmp.ne.s32.totalorder %s108, %s110
      %p117 = scmp.eq.s32.totalorder %s27, 1
      %p118 = por %p116, %p117
      %p119 = scmp.ne.s32.totalorder %s110, %s111
      %p120 = scmp.eq.s32.totalorder %s27, 0
      %p121 = por %p119, %p120
      %p122 = scmp.ne.s32.totalorder %s110, %s111
      %p123 = scmp.eq.s32.totalorder %s28, 1
      %p124 = por %p122, %p123
      %p126 = scmp.ne.s32.totalorder %s111, %s125
      %p127 = scmp.eq.s32.totalorder %s28, 0
      %p128 = por %p126, %p127
      %s130 = sadd.s32 %s129, 1
      %p133 = scmp.eq.s32.totalorder %s22, 1
      %p134 = scmp.ne.s32.totalorder %s129, %s131
      %p135 = scmp.eq.s32.totalorder %s22, 0
      %p136 = por %p134, %p135
      %p137 = scmp.ne.s32.totalorder %s129, %s131
      %p138 = scmp.eq.s32.totalorder %s27, 1
      %p139 = por %p137, %p138
      %p140 = scmp.ne.s32.totalorder %s131, %s132
      %p141 = scmp.eq.s32.totalorder %s27, 0
      %p142 = por %p140, %p141
      %p143 = scmp.ne.s32.totalorder %s131, %s132
      %p144 = scmp.eq.s32.totalorder %s28, 1
      %p145 = por %p143, %p144
      %p147 = scmp.ne.s32.totalorder %s132, %s146
      %p148 = scmp.eq.s32.totalorder %s28, 0
      %p149 = por %p147, %p148
      %s151 = sadd.s32 %s150, 1
      %p154 = scmp.eq.s32.totalorder %s22, 1
      %p155 = scmp.ne.s32.totalorder %s150, %s152
      %p156 = scmp.eq.s32.totalorder %s22, 0
      %p157 = por %p155, %p156
      %p158 = scmp.ne.s32.totalorder %s150, %s152
      %p159 = scmp.eq.s32.totalorder %s27, 1
      %p160 = por %p158, %p159
      %p161 = scmp.ne.s32.totalorder %s152, %s153
      %p162 = scmp.eq.s32.totalorder %s27, 0
      %p163 = por %p161, %p162
      %p164 = scmp.ne.s32.totalorder %s152, %s153
      %p165 = scmp.eq.s32.totalorder %s28, 1
      %p166 = por %p164, %p165
      %p168 = scmp.ne.s32.totalorder %s153, %s167
      %p169 = scmp.eq.s32.totalorder %s28, 0
      %p170 = por %p168, %p169
      %s172 = sadd.s32 %s171, 1
      %p175 = scmp.eq.s32.totalorder %s22, 1
      %p176 = scmp.ne.s32.totalorder %s171, %s173
      %p177 = scmp.eq.s32.totalorder %s22, 0
      %p178 = por %p176, %p177
      %p179 = scmp.ne.s32.totalorder %s171, %s173
      %p180 = scmp.eq.s32.totalorder %s27, 1
      %p181 = por %p179, %p180
      %p182 = scmp.ne.s32.totalorder %s173, %s174
      %p183 = scmp.eq.s32.totalorder %s27, 0
      %p184 = por %p182, %p183
      %p185 = scmp.ne.s32.totalorder %s173, %s174
      %p186 = scmp.eq.s32.totalorder %s28, 1
      %p187 = por %p185, %p186
      %p189 = scmp.ne.s32.totalorder %s174, %s188
      %p190 = scmp.eq.s32.totalorder %s28, 0
      %p191 = por %p189, %p190
      %s193 = sadd.s32 %s192, 1
      %p196 = scmp.eq.s32.totalorder %s22, 1
      %p197 = scmp.ne.s32.totalorder %s192, %s194
      %p198 = scmp.eq.s32.totalorder %s22, 0
      %p199 = por %p197, %p198
      %p200 = scmp.ne.s32.totalorder %s192, %s194
      %p201 = scmp.eq.s32.totalorder %s27, 1
      %p202 = por %p200, %p201
      %p203 = scmp.ne.s32.totalorder %s194, %s195
      %p204 = scmp.eq.s32.totalorder %s27, 0
      %p205 = por %p203, %p204
      %p206 = scmp.ne.s32.totalorder %s194, %s195
      %p207 = scmp.eq.s32.totalorder %s28, 1
      %p208 = por %p206, %p207
      %p210 = scmp.ne.s32.totalorder %s195, %s209
      %p211 = scmp.eq.s32.totalorder %s28, 0
      %p212 = por %p210, %p211
      %s214 = sadd.s32 %s213, 1
      %p217 = scmp.eq.s32.totalorder %s22, 1
      %p218 = scmp.ne.s32.totalorder %s213, %s215
      %p219 = scmp.eq.s32.totalorder %s22, 0
      %p220 = por %p218, %p219
      %p221 = scmp.ne.s32.totalorder %s213, %s215
      %p222 = scmp.eq.s32.totalorder %s27, 1
      %p223 = por %p221, %p222
      %p224 = scmp.ne.s32.totalorder %s215, %s216
      %p225 = scmp.eq.s32.totalorder %s27, 0
      %p226 = por %p224, %p225
      %p227 = scmp.ne.s32.totalorder %s215, %s216
      %p228 = scmp.eq.s32.totalorder %s28, 1
      %p229 = por %p227, %p228
      %p231 = scmp.ne.s32.totalorder %s216, %s230
      %p232 = scmp.eq.s32.totalorder %s28, 0
      %p233 = por %p231, %p232
      %s234 = ssub.s32 %s22, %s29
      %p235 = scmp.eq.s32.totalorder %s234, 0
      %s237 = sadd.s32 %s236, 1
      %s238 = scalar_select %p235, %s236, %s237
      %p241 = pneg %p235
      %p242 = scmp.eq.s32.totalorder %s22, 1
      %p243 = por %p241, %p242
      %p244 = scmp.ne.s32.totalorder %s236, %s239
      %p245 = scmp.eq.s32.totalorder %s22, 0
      %p246 = por %p244, %p245
      %p247 = scmp.ne.s32.totalorder %s236, %s239
      %p248 = scmp.eq.s32.totalorder %s27, 1
      %p249 = por %p247, %p248
      %p250 = scmp.ne.s32.totalorder %s239, %s240
      %p251 = scmp.eq.s32.totalorder %s27, 0
      %p252 = por %p250, %p251
      %p253 = scmp.ne.s32.totalorder %s239, %s240
      %p254 = scmp.eq.s32.totalorder %s28, 1
      %p255 = por %p253, %p254
      %p257 = scmp.ne.s32.totalorder %s240, %s256
      %p258 = scmp.eq.s32.totalorder %s28, 0
      %p259 = por %p257, %p258
      %p260 = scmp.le.s32.totalorder 1, %s22
      %p261 = scmp.lt.s32.totalorder %s22, 3
      %p262 = pnand %p260, %p261
      %p263 = pneg %p262
      // Predicated region
      $region9: #{tpu_custom_call.1} parent=5 // pred_check
        _
      $region10: #{tpu_custom_call.1} parent=5 // pred_check_branch
        %265 = sbr.rel (%p262) target = $region12
      $region11: #{tpu_custom_call.1} parent=5 // pred_region
        %s266 = ssub.s32 %s22, 1
        // Predicated region
        $region13: #{tpu_custom_call.1} parent=11 // pred_check
          %p267 = pneg %p121
        $region14: #{tpu_custom_call.1} parent=11 // pred_check_branch
          %269 = sbr.rel (%p267) target = $region16
        $region15: #{tpu_custom_call.1} parent=11 // pred_region
          %s271 = ssub.s32 2048, 2048
          %272 = vsyncadd [#allocation6], %s271
          %s273 = sshll.u32 [#allocation5], 4
          %s274 = int_to_ptr.vmem [resolvable:$true] %s273
          %279 = dma.hbm_to_vmem [thread:$0]  %s3, 2048, %s274, [#allocation6], 128, 128, 8
        $region16: #{tpu_custom_call.1} parent=11 // pred_fallthru
          _
        // Predicated region
        $region17: #{tpu_custom_call.1} parent=11 // pred_check
          %p280 = pneg %p142
        $region18: #{tpu_custom_call.1} parent=11 // pred_check_branch
          %282 = sbr.rel (%p280) target = $region20
        $region19: #{tpu_custom_call.1} parent=11 // pred_region
          _
        $region20: #{tpu_custom_call.1} parent=11 // pred_fallthru
          _
        // Predicated region
        $region21: #{tpu_custom_call.1} parent=11 // pred_check
          %p283 = pneg %p163
        $region22: #{tpu_custom_call.1} parent=11 // pred_check_branch
          %285 = sbr.rel (%p283) target = $region24
        $region23: #{tpu_custom_call.1} parent=11 // pred_region
          _
        $region24: #{tpu_custom_call.1} parent=11 // pred_fallthru
          _
        // Predicated region
        $region25: #{tpu_custom_call.1} parent=11 // pred_check
          %p286 = pneg %p184
        $region26: #{tpu_custom_call.1} parent=11 // pred_check_branch
          %288 = sbr.rel (%p286) target = $region28
        $region27: #{tpu_custom_call.1} parent=11 // pred_region
          _
        $region28: #{tpu_custom_call.1} parent=11 // pred_fallthru
          _
        // Predicated region
        $region29: #{tpu_custom_call.1} parent=11 // pred_check
          %p289 = pneg %p205
        $region30: #{tpu_custom_call.1} parent=11 // pred_check_branch
          %291 = sbr.rel (%p289) target = $region32
        $region31: #{tpu_custom_call.1} parent=11 // pred_region
          %s293 = ssub.s32 2048, 2048
          %294 = vsyncadd [#allocation6], %s293
          %s295 = sshll.u32 [#allocation7], 4
          %s296 = int_to_ptr.vmem [resolvable:$true] %s295
          %301 = dma.hbm_to_vmem [thread:$0]  %s7, 2048, %s296, [#allocation6], 128, 128, 8
        $region32: #{tpu_custom_call.1} parent=11 // pred_fallthru
          _
        // Predicated region
        $region33: #{tpu_custom_call.1} parent=11 // pred_check
          %p302 = pneg %p226
        $region34: #{tpu_custom_call.1} parent=11 // pred_check_branch
          %304 = sbr.rel (%p302) target = $region36
        $region35: #{tpu_custom_call.1} parent=11 // pred_region
          _
        $region36: #{tpu_custom_call.1} parent=11 // pred_fallthru
          _
      $region12: #{tpu_custom_call.1} parent=5 // pred_fallthru
        _
      %p305 = scmp.lt.s32.totalorder %s22, 2
      // Predicated region
      $region37: #{tpu_custom_call.1} parent=5 // pred_check
        %p306 = pneg %p305
      $region38: #{tpu_custom_call.1} parent=5 // pred_check_branch
        %308 = sbr.rel (%p306) target = $region40
      $region39: #{tpu_custom_call.1} parent=5 // pred_region
        // Predicated region
        $region41: #{tpu_custom_call.1} parent=39 // pred_check
          %p309 = pneg %p42
        $region42: #{tpu_custom_call.1} parent=39 // pred_check_branch
          %311 = sbr.rel (%p309) target = $region44
        $region43: #{tpu_custom_call.1} parent=39 // pred_region
          %s312 = smul.u32 2, %s22
          %p313 = scmp.lt.s32.totalorder %s312, 3
          %s314 = scalar_select %p313, %s312, 3
          %s315 = smul.addr %s314, 4
          %s316 = scalar_lea.vmem %s0, %s315
          %s317 = smul.u32 2, %s22
        $region44: #{tpu_custom_call.1} parent=39 // pred_fallthru
          _
        // Predicated region
        $region45: #{tpu_custom_call.1} parent=39 // pred_check
          %p318 = pneg %p68
        $region46: #{tpu_custom_call.1} parent=39 // pred_check_branch
          %320 = sbr.rel (%p318) target = $region48
        $region47: #{tpu_custom_call.1} parent=39 // pred_region
          %s321 = smul.u32 2, %s22
          %p322 = scmp.lt.s32.totalorder %s321, 3
          %s323 = scalar_select %p322, %s321, 3
          %s324 = smul.addr %s323, 4
          %s325 = scalar_lea.vmem %s1, %s324
          %s326 = smul.u32 2, %s22
        $region48: #{tpu_custom_call.1} parent=39 // pred_fallthru
          _
        // Predicated region
        $region49: #{tpu_custom_call.1} parent=39 // pred_check
          %p327 = pneg %p94
        $region50: #{tpu_custom_call.1} parent=39 // pred_check_branch
          %329 = sbr.rel (%p327) target = $region52
        $region51: #{tpu_custom_call.1} parent=39 // pred_region
          %s330 = sand.u32 %s84, 1
          %s331 = scalar_lea.sflag [#allocation3], %s330
          %s332 = sand.u32 %s84, 1
          %s333 = smul.addr %s332, 8
          %s334 = scalar_lea.vmem [#allocation2], %s333
          %s335 = smul.u32 2, %s22
          %s337 = ssub.s32 128, 128
          %338 = vsyncadd %s331, %s337
          %s339 = smul.addr %s335, 64
          %s340 = scalar_lea.hbm %s2, %s339
          %s341 = sshll.u32 %s334, 4
          %s342 = int_to_ptr.vmem [resolvable:$true] %s341
          %347 = dma.hbm_to_vmem [thread:$0]  %s340, 128, %s342, %s331, 64, 64, 4
        $region52: #{tpu_custom_call.1} parent=39 // pred_fallthru
          _
      $region40: #{tpu_custom_call.1} parent=5 // pred_fallthru
        _
      %p348 = scmp.le.s32.totalorder 1, %s22
      %p349 = scmp.lt.s32.totalorder %s22, 3
      %p350 = pnand %p348, %p349
      %p351 = pneg %p350
      // Predicated region
      $region53: #{tpu_custom_call.1} parent=5 // pred_check
        _
      $region54: #{tpu_custom_call.1} parent=5 // pred_check_branch
        %353 = sbr.rel (%p350) target = $region56
      $region55: #{tpu_custom_call.1} parent=5 // pred_region
        %s354 = ssub.s32 %s22, 1
        %s355 = sand.u32 %s87, 1
        %s356 = scalar_lea.sflag [#allocation3], %s355
        %s357 = sand.u32 %s87, 1
        %s358 = smul.addr %s357, 8
        %s359 = scalar_lea.vmem [#allocation2], %s358
        // Predicated region
        $region57: #{tpu_custom_call.1} parent=55 // pred_check
          %p360 = pneg %p100
        $region58: #{tpu_custom_call.1} parent=55 // pred_check_branch
          %362 = sbr.rel (%p360) target = $region60
        $region59: #{tpu_custom_call.1} parent=55 // pred_region
          %363 = dma.done %s356, 128
        $region60: #{tpu_custom_call.1} parent=55 // pred_fallthru
          _
        // Predicated region
        $region61: #{tpu_custom_call.1} parent=55 // pred_check
          %p364 = pneg %p121
        $region62: #{tpu_custom_call.1} parent=55 // pred_check_branch
          %366 = sbr.rel (%p364) target = $region64
        $region63: #{tpu_custom_call.1} parent=55 // pred_region
          %367 = dma.done [#allocation6], 2048
        $region64: #{tpu_custom_call.1} parent=55 // pred_fallthru
          _
        // Predicated region
        $region65: #{tpu_custom_call.1} parent=55 // pred_check
          %p368 = pneg %p205
        $region66: #{tpu_custom_call.1} parent=55 // pred_check_branch
          %370 = sbr.rel (%p368) target = $region68
        $region67: #{tpu_custom_call.1} parent=55 // pred_region
          %371 = dma.done [#allocation6], 2048
        $region68: #{tpu_custom_call.1} parent=55 // pred_fallthru
          _
        %s372 = smul.u32 2, %s27
        %p373 = scmp.lt.s32.totalorder %s372, 3
        %s374 = scalar_select %p373, %s372, 3
        %s375 = smul.addr %s374, 4
        %s376 = scalar_lea.vmem %s0, %s375
        %p377 = pneg %p48
        %p378 = pneg %p45
        %s379 = smul.u32 2, %s27
        %p380 = scmp.lt.s32.totalorder %s379, 3
        %s381 = scalar_select %p380, %s379, 3
        %s382 = smul.addr %s381, 4
        %s383 = scalar_lea.vmem %s1, %s382
        %p384 = pneg %p74
        %p385 = pneg %p71
        %s386 = sand.u32 %s87, 1
        %s387 = scalar_lea.sflag [#allocation3], %s386
        %s388 = sand.u32 %s87, 1
        %s389 = smul.addr %s388, 8
        %s390 = scalar_lea.vmem [#allocation2], %s389
        %p391 = pneg %p100
        %p392 = pneg %p97
        %p393 = pneg %p121
        %p394 = pneg %p118
        %p395 = pneg %p142
        %p396 = pneg %p139
        %p397 = pneg %p163
        %p398 = pneg %p160
        %p399 = pneg %p184
        %p400 = pneg %p181
        %p401 = pneg %p205
        %p402 = pneg %p202
        %p403 = pneg %p226
        %p404 = pneg %p223
        %p405 = pneg %p252
        %p406 = pneg %p249
        %s407 = sand.u32 %s239, 1
        %s408 = scalar_lea.sflag [#allocation4], %s407
        %s409 = sand.u32 %s239, 1
        %s410 = smul.addr %s409, 16
        %s411 = scalar_lea.vmem [#allocation8], %s410
        %s412 = smul.u32 2, %s27
        %p413 = scmp.lt.s32.totalorder %s412, 3
        %s414 = scalar_select %p413, %s412, 3
        %s415 = smul.addr %s414, 4
        %s416 = scalar_lea.vmem %s0, %s415
        %s417 = smul.u32 2, %s27
        %s418 = smul.u32 2, %s27
        %p419 = scmp.lt.s32.totalorder %s418, 3
        %s420 = scalar_select %p419, %s418, 3
        %s421 = smul.addr %s420, 4
        %s422 = scalar_lea.vmem %s1, %s421
        %s423 = smul.u32 2, %s27
        %s424 = smul.u32 2, %s27
        %s425 = smul.u32 2, %s27
        %v427 = vld [vmem:[%s416] sm:$0xf]
        %v428 = vld [vmem:[%s416 + $0x4] sm:$0xf]
        %v429 = vld [vmem:[%s422] sm:$0xf]
        %v430 = vld [vmem:[%s422 + $0x4] sm:$0xf]
        %v431 = vld [vmem:[%s359] sm:$0xf]
        %v432 = vld [vmem:[%s359 + $0x4] sm:$0xf]
        %v433 = vunpack.c.l.bf16 %v431
        %v434 = vunpack.c.l.bf16 %v432
        %v435 = vld [vmem:[#allocation5] sm:$0xff]
        %v436 = vld [vmem:[#allocation5 + $0x8] sm:$0xff]
        %v437 = vld [vmem:[#allocation5 + $0x10] sm:$0xff]
        %v438 = vld [vmem:[#allocation5 + $0x18] sm:$0xff]
        %v439 = vld [vmem:[#allocation5 + $0x20] sm:$0xff]
        %v440 = vld [vmem:[#allocation5 + $0x28] sm:$0xff]
        %v441 = vld [vmem:[#allocation5 + $0x30] sm:$0xff]
        %v442 = vld [vmem:[#allocation5 + $0x38] sm:$0xff]
        %v443 = vld [vmem:[#allocation5 + $0x40] sm:$0xff]
        %v444 = vld [vmem:[#allocation5 + $0x48] sm:$0xff]
        %v445 = vld [vmem:[#allocation5 + $0x50] sm:$0xff]
        %v446 = vld [vmem:[#allocation5 + $0x58] sm:$0xff]
        %v447 = vld [vmem:[#allocation5 + $0x60] sm:$0xff]
        %v448 = vld [vmem:[#allocation5 + $0x68] sm:$0xff]
        %v449 = vld [vmem:[#allocation5 + $0x70] sm:$0xff]
        %v450 = vld [vmem:[#allocation5 + $0x78] sm:$0xff]
        %v451 = vld [vmem:[%s4] sm:$0x3]
        %v453 = vlaneseq
        %v454 = vshrl.u32 %v453, 7
        %v455 = vsub.s32 0, %v454
        %v456 = vrot.slane %v451, %v455
        %v457 = vlaneseq
        %v458 = vshrl.u32 %v457, 7
        %v459 = vsub.s32 1, %v458
        %v460 = vrot.slane %v451, %v459
        %v465 = vunpack.c.l.b16 %v427
        %v466 = vunpack.c.l.b16 %v428
        %v467 = vpack.c.b16 %v466, %v465
        %v485 = vunpack.c.l.b16 %v435
        %v486 = vunpack.c.h.b16 %v435
        %v487 = vunpack.c.l.b16 %v436
        %v488 = vunpack.c.h.b16 %v436
        %v489 = vunpack.c.l.b16 %v437
        %v490 = vunpack.c.h.b16 %v437
        %v491 = vunpack.c.l.b16 %v438
        %v492 = vunpack.c.h.b16 %v438
        %v493 = vunpack.c.l.b16 %v439
        %v494 = vunpack.c.h.b16 %v439
        %v495 = vunpack.c.l.b16 %v440
        %v496 = vunpack.c.h.b16 %v440
        %v497 = vunpack.c.l.b16 %v441
        %v498 = vunpack.c.h.b16 %v441
        %v499 = vunpack.c.l.b16 %v442
        %v500 = vunpack.c.h.b16 %v442
        %v501 = vunpack.c.l.b16 %v443
        %v502 = vunpack.c.h.b16 %v443
        %v503 = vunpack.c.l.b16 %v444
        %v504 = vunpack.c.h.b16 %v444
        %v505 = vunpack.c.l.b16 %v445
        %v506 = vunpack.c.h.b16 %v445
        %v507 = vunpack.c.l.b16 %v446
        %v508 = vunpack.c.h.b16 %v446
        %v509 = vunpack.c.l.b16 %v447
        %v510 = vunpack.c.h.b16 %v447
        %v511 = vunpack.c.l.b16 %v448
        %v512 = vunpack.c.h.b16 %v448
        %v513 = vunpack.c.l.b16 %v449
        %v514 = vunpack.c.h.b16 %v449
        %v515 = vunpack.c.l.b16 %v450
        %v516 = vunpack.c.h.b16 %v450
        %v517 = vpack.c.b16 %v487, %v485
        %v518 = vpack.c.b16 %v488, %v486
        %v519 = vpack.c.b16 %v491, %v489
        %v520 = vpack.c.b16 %v492, %v490
        %v521 = vpack.c.b16 %v495, %v493
        %v522 = vpack.c.b16 %v496, %v494
        %v523 = vpack.c.b16 %v499, %v497
        %v524 = vpack.c.b16 %v500, %v498
        %v525 = vpack.c.b16 %v503, %v501
        %v526 = vpack.c.b16 %v504, %v502
        %v527 = vpack.c.b16 %v507, %v505
        %v528 = vpack.c.b16 %v508, %v506
        %v529 = vpack.c.b16 %v511, %v509
        %v530 = vpack.c.b16 %v512, %v510
        %v531 = vpack.c.b16 %v515, %v513
        %v532 = vpack.c.b16 %v516, %v514
        %549 = vmatprep.subr.bf16.mxu0 %v518
        %550 = vmatpush1.bf16.msra.mxu0 %v517
        %551 = vmatprep.subr.bf16.mxu0 %v520
        %552 = vmatpush1.bf16.msra.mxu0 %v519
        %553 = vmatprep.subr.bf16.mxu0 %v522
        %554 = vmatpush1.bf16.msra.mxu0 %v521
        %555 = vmatprep.subr.bf16.mxu0 %v524
        %556 = vmatpush1.bf16.msra.mxu0 %v523
        %557 = vmatprep.subr.bf16.mxu0 %v526
        %558 = vmatpush1.bf16.msra.mxu0 %v525
        %559 = vmatprep.subr.bf16.mxu0 %v528
        %560 = vmatpush1.bf16.msra.mxu0 %v527
        %561 = vmatprep.subr.bf16.mxu0 %v530
        %562 = vmatpush1.bf16.msra.mxu0 %v529
        %563 = vmatprep.subr.bf16.mxu0 %v532
        %564 = vmatpush1.bf16.msra.mxu0 %v531
        %565 = vmatprep.subr.bf16.mxu0 0
        %566 = vmatpush1.bf16.msra.mxu0 0
        %567 = vmatprep.subr.bf16.mxu0 0
        %568 = vmatpush1.bf16.msra.mxu0 0
        %569 = vmatprep.subr.bf16.mxu0 0
        %570 = vmatpush1.bf16.msra.mxu0 0
        %571 = vmatprep.subr.bf16.mxu0 0
        %572 = vmatpush1.bf16.msra.mxu0 0
        %573 = vmatprep.subr.bf16.mxu0 0
        %574 = vmatpush1.bf16.msra.mxu0 0
        %575 = vmatprep.subr.bf16.mxu0 0
        %576 = vmatpush1.bf16.msra.mxu0 0
        %577 = vmatprep.subr.bf16.mxu0 0
        %578 = vmatpush1.bf16.msra.mxu0 0
        %579 = vmatprep.subr.bf16.mxu0 0
        %580 = vmatpush1.bf16.msra.mxu0 0
        %581 = vmatprep.mubr.bf16.mxu0 0
        %582 = vmatmul.mubr.bf16.gmra.mrb[0].mxu0 %v467
        %v583 = vpop.f32.mrb[0].mxu0
        %v584 = vadd.f32 %v456, %v583
        %v585 = vpop.f32.mrb[0].mxu0
        %v586 = vadd.f32 %v460, %v585
        %v587 = vpop.f32.mrb[0].mxu0
        %v588 = vadd.f32 %v456, %v587
        %v589 = vpop.f32.mrb[0].mxu0
        %v590 = vadd.f32 %v460, %v589
        %591 = vdwg.mxu0
        %v592 = vsub.f32 0.0, %v586
        %v593 = vsub.f32 0.0, %v590
        %v594 = vmul.f32 %v592, 1.442695
        %v595 = vpow.pop %v594
        %v596 = vmul.f32 %v593, 1.442695
        %v597 = vpow.pop %v596
        %v598 = vadd.f32 %v595, 1.0
        %v599 = vadd.f32 %v597, 1.0
        %v600 = vrcp.pop %v598
        %v601 = vrcp.pop %v599
        %v602 = vld [vmem:[%s5] sm:$0xf]
        %v603 = vld [vmem:[%s6] sm:$0x1]
        %v605 = vlaneseq
        %v606 = vshrl.u32 %v605, 7
        %v607 = vsub.s32 0, %v606
        %v608 = vrot.slane %v603, %v607
        %v612 = vunpack.c.l.b16 %v429
        %v613 = vunpack.c.l.b16 %v430
        %v614 = vpack.c.b16 %v613, %v612
        %vm615 = vcmask 64512
        %v617 = vsel %vm615, %v614, 0
        %vm619 = vcmask 1043456
        %v621 = vsel %vm619, %v602, 0
        %623 = vmatprep.subr.bf16.mxu0 0
        %624 = vmatpush1.bf16.msra.mxu0 %v621
        %625 = vmatprep.subr.bf16.mxu0 0
        %626 = vmatpush1.bf16.msra.mxu0 0
        %627 = vmatprep.subr.bf16.mxu0 0
        %628 = vmatpush1.bf16.msra.mxu0 0
        %629 = vmatprep.subr.bf16.mxu0 0
        %630 = vmatpush1.bf16.msra.mxu0 0
        %631 = vmatprep.subr.bf16.mxu0 0
        %632 = vmatpush1.bf16.msra.mxu0 0
        %633 = vmatprep.subr.bf16.mxu0 0
        %634 = vmatpush1.bf16.msra.mxu0 0
        %635 = vmatprep.subr.bf16.mxu0 0
        %636 = vmatpush1.bf16.msra.mxu0 0
        %637 = vmatprep.subr.bf16.mxu0 0
        %638 = vmatpush1.bf16.msra.mxu0 0
        %639 = vmatprep.subr.bf16.mxu0 0
        %640 = vmatpush1.bf16.msra.mxu0 0
        %641 = vmatprep.subr.bf16.mxu0 0
        %642 = vmatpush1.bf16.msra.mxu0 0
        %643 = vmatprep.subr.bf16.mxu0 0
        %644 = vmatpush1.bf16.msra.mxu0 0
        %645 = vmatprep.subr.bf16.mxu0 0
        %646 = vmatpush1.bf16.msra.mxu0 0
        %647 = vmatprep.subr.bf16.mxu0 0
        %648 = vmatpush1.bf16.msra.mxu0 0
        %649 = vmatprep.subr.bf16.mxu0 0
        %650 = vmatpush1.bf16.msra.mxu0 0
        %651 = vmatprep.subr.bf16.mxu0 0
        %652 = vmatpush1.bf16.msra.mxu0 0
        %653 = vmatprep.subr.bf16.mxu0 0
        %654 = vmatpush1.bf16.msra.mxu0 0
        %655 = vmatprep.mubr.bf16.mxu0 0
        %656 = vmatmul.mubr.bf16.gmra.mrb[0].mxu0 %v617
        %v657 = vpop.f32.mrb[0].mxu0
        %v658 = vadd.f32 %v608, %v657
        %v659 = vpop.f32.mrb[0].mxu0
        %v660 = vpop.f32.mrb[0].mxu0
        %v661 = vadd.f32 %v608, %v660
        %v662 = vpop.f32.mrb[0].mxu0
        %663 = vdwg.mxu0
        %v664 = vsub.f32 1.0, %v600
        %v665 = vsub.f32 1.0, %v601
        %v666 = vsub.f32 %v584, %v433
        %v667 = vsub.f32 %v588, %v434
        %v668 = vmul.f32 %v664, %v666
        %v669 = vmul.f32 %v665, %v667
        %v670 = vmul.f32 %v668, %v658
        %v671 = vmul.f32 %v669, %v661
        %v672 = vmax.f32 %v670, 0.0
        %v673 = vmax.f32 %v671, 0.0
        %v674 = vpack.c.bf16 %v673, %v672
        %v675 = vld [vmem:[#allocation7] sm:$0xff]
        %v676 = vld [vmem:[#allocation7 + $0x8] sm:$0xff]
        %v677 = vld [vmem:[#allocation7 + $0x10] sm:$0xff]
        %v678 = vld [vmem:[#allocation7 + $0x18] sm:$0xff]
        %v679 = vld [vmem:[#allocation7 + $0x20] sm:$0xff]
        %v680 = vld [vmem:[#allocation7 + $0x28] sm:$0xff]
        %v681 = vld [vmem:[#allocation7 + $0x30] sm:$0xff]
        %v682 = vld [vmem:[#allocation7 + $0x38] sm:$0xff]
        %v683 = vld [vmem:[#allocation7 + $0x40] sm:$0xff]
        %v684 = vld [vmem:[#allocation7 + $0x48] sm:$0xff]
        %v685 = vld [vmem:[#allocation7 + $0x50] sm:$0xff]
        %v686 = vld [vmem:[#allocation7 + $0x58] sm:$0xff]
        %v687 = vld [vmem:[#allocation7 + $0x60] sm:$0xff]
        %v688 = vld [vmem:[#allocation7 + $0x68] sm:$0xff]
        %v689 = vld [vmem:[#allocation7 + $0x70] sm:$0xff]
        %v690 = vld [vmem:[#allocation7 + $0x78] sm:$0xff]
        %v691 = vld [vmem:[%s8] sm:$0x3]
        %v693 = vlaneseq
        %v694 = vshrl.u32 %v693, 7
        %v695 = vsub.s32 0, %v694
        %v696 = vrot.slane %v691, %v695
        %v697 = vlaneseq
        %v698 = vshrl.u32 %v697, 7
        %v699 = vsub.s32 1, %v698
        %v700 = vrot.slane %v691, %v699
        %v719 = vunpack.c.l.b16 %v675
        %v720 = vunpack.c.h.b16 %v675
        %v721 = vunpack.c.l.b16 %v676
        %v722 = vunpack.c.h.b16 %v676
        %v723 = vunpack.c.l.b16 %v677
        %v724 = vunpack.c.h.b16 %v677
        %v725 = vunpack.c.l.b16 %v678
        %v726 = vunpack.c.h.b16 %v678
        %v727 = vunpack.c.l.b16 %v679
        %v728 = vunpack.c.h.b16 %v679
        %v729 = vunpack.c.l.b16 %v680
        %v730 = vunpack.c.h.b16 %v680
        %v731 = vunpack.c.l.b16 %v681
        %v732 = vunpack.c.h.b16 %v681
        %v733 = vunpack.c.l.b16 %v682
        %v734 = vunpack.c.h.b16 %v682
        %v735 = vunpack.c.l.b16 %v683
        %v736 = vunpack.c.h.b16 %v683
        %v737 = vunpack.c.l.b16 %v684
        %v738 = vunpack.c.h.b16 %v684
        %v739 = vunpack.c.l.b16 %v685
        %v740 = vunpack.c.h.b16 %v685
        %v741 = vunpack.c.l.b16 %v686
        %v742 = vunpack.c.h.b16 %v686
        %v743 = vunpack.c.l.b16 %v687
        %v744 = vunpack.c.h.b16 %v687
        %v745 = vunpack.c.l.b16 %v688
        %v746 = vunpack.c.h.b16 %v688
        %v747 = vunpack.c.l.b16 %v689
        %v748 = vunpack.c.h.b16 %v689
        %v749 = vunpack.c.l.b16 %v690
        %v750 = vunpack.c.h.b16 %v690
        %v751 = vpack.c.b16 %v721, %v719
        %v752 = vpack.c.b16 %v722, %v720
        %v753 = vpack.c.b16 %v725, %v723
        %v754 = vpack.c.b16 %v726, %v724
        %v755 = vpack.c.b16 %v729, %v727
        %v756 = vpack.c.b16 %v730, %v728
        %v757 = vpack.c.b16 %v733, %v731
        %v758 = vpack.c.b16 %v734, %v732
        %v759 = vpack.c.b16 %v737, %v735
        %v760 = vpack.c.b16 %v738, %v736
        %v761 = vpack.c.b16 %v741, %v739
        %v762 = vpack.c.b16 %v742, %v740
        %v763 = vpack.c.b16 %v745, %v743
        %v764 = vpack.c.b16 %v746, %v744
        %v765 = vpack.c.b16 %v749, %v747
        %v766 = vpack.c.b16 %v750, %v748
        %783 = vmatprep.subr.bf16.mxu0 %v752
        %784 = vmatpush1.bf16.msra.mxu0 %v751
        %785 = vmatprep.subr.bf16.mxu0 %v754
        %786 = vmatpush1.bf16.msra.mxu0 %v753
        %787 = vmatprep.subr.bf16.mxu0 %v756
        %788 = vmatpush1.bf16.msra.mxu0 %v755
        %789 = vmatprep.subr.bf16.mxu0 %v758
        %790 = vmatpush1.bf16.msra.mxu0 %v757
        %791 = vmatprep.subr.bf16.mxu0 %v760
        %792 = vmatpush1.bf16.msra.mxu0 %v759
        %793 = vmatprep.subr.bf16.mxu0 %v762
        %794 = vmatpush1.bf16.msra.mxu0 %v761
        %795 = vmatprep.subr.bf16.mxu0 %v764
        %796 = vmatpush1.bf16.msra.mxu0 %v763
        %797 = vmatprep.subr.bf16.mxu0 %v766
        %798 = vmatpush1.bf16.msra.mxu0 %v765
        %799 = vmatprep.subr.bf16.mxu0 0
        %800 = vmatpush1.bf16.msra.mxu0 0
        %801 = vmatprep.subr.bf16.mxu0 0
        %802 = vmatpush1.bf16.msra.mxu0 0
        %803 = vmatprep.subr.bf16.mxu0 0
        %804 = vmatpush1.bf16.msra.mxu0 0
        %805 = vmatprep.subr.bf16.mxu0 0
        %806 = vmatpush1.bf16.msra.mxu0 0
        %807 = vmatprep.subr.bf16.mxu0 0
        %808 = vmatpush1.bf16.msra.mxu0 0
        %809 = vmatprep.subr.bf16.mxu0 0
        %810 = vmatpush1.bf16.msra.mxu0 0
        %811 = vmatprep.subr.bf16.mxu0 0
        %812 = vmatpush1.bf16.msra.mxu0 0
        %813 = vmatprep.subr.bf16.mxu0 0
        %814 = vmatpush1.bf16.msra.mxu0 0
        %815 = vmatprep.mubr.bf16.mxu0 0
        %816 = vmatmul.mubr.bf16.gmra.mrb[0].mxu0 %v674
        %v817 = vpop.f32.mrb[0].mxu0
        %v818 = vadd.f32 %v696, %v817
        %v819 = vpop.f32.mrb[0].mxu0
        %v820 = vadd.f32 %v700, %v819
        %v821 = vpop.f32.mrb[0].mxu0
        %v822 = vadd.f32 %v696, %v821
        %v823 = vpop.f32.mrb[0].mxu0
        %v824 = vadd.f32 %v700, %v823
        %825 = vdwg.mxu0
        %v826 = vsub.f32 0.0, %v820
        %v827 = vsub.f32 0.0, %v824
        %v828 = vmul.f32 %v826, 1.442695
        %v829 = vpow.pop %v828
        %v830 = vmul.f32 %v827, 1.442695
        %v831 = vpow.pop %v830
        %v832 = vadd.f32 %v829, 1.0
        %v833 = vadd.f32 %v831, 1.0
        %v834 = vrcp.pop %v832
        %v835 = vrcp.pop %v833
        %v836 = vmul.f32 %v834, %v818
        %v837 = vmul.f32 %v835, %v822
        %838 = vst [vmem:[%s411] sm:$0xff] %v836
        %839 = vst [vmem:[%s411 + $0x8] sm:$0xff] %v837
        %s840 = sand.u32 %s239, 1
        %s841 = scalar_lea.sflag [#allocation4], %s840
        %s842 = sand.u32 %s239, 1
        %s843 = smul.addr %s842, 16
        %s844 = scalar_lea.vmem [#allocation8], %s843
        // Predicated region
        $region69: #{tpu_custom_call.1} parent=55 // pred_check
          %p845 = pneg %p249
        $region70: #{tpu_custom_call.1} parent=55 // pred_check_branch
          %847 = sbr.rel (%p845) target = $region72
        $region71: #{tpu_custom_call.1} parent=55 // pred_region
          %s848 = smul.u32 2, %s27
          %s850 = ssub.s32 256, 256
          %851 = vsyncadd %s841, %s850
          %s852 = smul.addr %s848, 128
          %s853 = scalar_lea.hbm %s9, %s852
          %s854 = sshll.u32 %s844, 4
          %s855 = int_to_ptr.vmem [resolvable:$true] %s854
          %860 = dma.vmem_to_hbm [thread:$0]  %s855, 256, %s853, %s841, 128, 128, 8
        $region72: #{tpu_custom_call.1} parent=55 // pred_fallthru
          _
      $region56: #{tpu_custom_call.1} parent=5 // pred_fallthru
        _
      %p861 = scmp.le.s32.totalorder 2, %s22
      // Predicated region
      $region73: #{tpu_custom_call.1} parent=5 // pred_check
        %p862 = pneg %p861
      $region74: #{tpu_custom_call.1} parent=5 // pred_check_branch
        %864 = sbr.rel (%p862) target = $region76
      $region75: #{tpu_custom_call.1} parent=5 // pred_region
        %s865 = ssub.s32 %s22, 2
        // Predicated region
        $region77: #{tpu_custom_call.1} parent=75 // pred_check
          %p866 = pneg %p255
        $region78: #{tpu_custom_call.1} parent=75 // pred_check_branch
          %868 = sbr.rel (%p866) target = $region80
        $region79: #{tpu_custom_call.1} parent=75 // pred_region
          %s869 = sand.u32 %s240, 1
          %s870 = scalar_lea.sflag [#allocation4], %s869
          %s871 = sand.u32 %s240, 1
          %s872 = smul.addr %s871, 16
          %s873 = scalar_lea.vmem [#allocation8], %s872
          %874 = dma.done %s870, 256
        $region80: #{tpu_custom_call.1} parent=75 // pred_fallthru
          _
      $region76: #{tpu_custom_call.1} parent=5 // pred_fallthru
        _
    $region6: #{tpu_custom_call.1} parent=1 // loop_footer
      %s26 = sadd.s32 1, %s22
    $region7: #{tpu_custom_call.1} parent=1 // loop_footer_branch
      %21 = sbr.rel target = $region3
    $region8: #{tpu_custom_call.1} parent=1 // loop_exit
      _
    %875 = vsyncpa [#allocation3], 1
    %s876 = scalar_lea.sflag [#allocation3], 1
    %877 = vsyncpa %s876, 1
    %878 = vsyncpa [#allocation6], 1
    %879 = vsyncpa [#allocation4], 1
    %s880 = scalar_lea.sflag [#allocation4], 1
    %881 = vsyncpa %s880, 1

// kernel: tpu_custom_call.1
$region0: #{tpu_custom_call.1}
  #allocation0 [shape = 'u32[]', space=smem, size = 0x4, offset = 0x4, fixed_abs, tag = 'smem constant byte address 0x4 - core index']
  #allocation1 [shape = 'u32[144,128]{1,0:T(1,128)}', space=vmem, size = 0x12000, scoped, tag = 'internal scratch']
  %s0 = inlined_call_operand.vmem [shape: bf16[32,128], index: 0, kind: input, shape index: {}]
  %s1 = inlined_call_operand.vmem [shape: bf16[32,8], index: 1, kind: input, shape index: {}]
  %s2 = inlined_call_operand.hbm [shape: bf16[32,128], index: 2, kind: input, shape index: {}]
  %s3 = inlined_call_operand.hbm [shape: bf16[128,256], index: 3, kind: input, shape index: {}]
  %s4 = inlined_call_operand.vmem [shape: f32[1,256], index: 4, kind: input, shape index: {}]
  %s5 = inlined_call_operand.vmem [shape: bf16[8,128], index: 5, kind: input, shape index: {}]
  %s6 = inlined_call_operand.vmem [shape: f32[1,128], index: 6, kind: input, shape index: {}]
  %s7 = inlined_call_operand.hbm [shape: bf16[128,256], index: 7, kind: input, shape index: {}]
  %s8 = inlined_call_operand.vmem [shape: f32[1,256], index: 8, kind: input, shape index: {}]
  %s9 = inlined_call_operand.hbm [shape: f32[32,128], index: 9, kind: output, shape index: {}]
  %s10 = sld [smem:[#allocation0]]
  $region81: #{tpu_custom_call.1} parent=0
    _
  %s12 = ssub.s32 1, %s10
  %s13 = scalar_select 0, %s12, %s10
  $region1: #{tpu_custom_call.1} parent=0
    #allocation2 [shape = 'u8[8192]{0}', space=vmem, size = 0x2000, scoped, tag = 'input window, operand 2']
    #allocation3 [shape = 's32[2]{0}', space=sflag, size = 0x8, scoped, tag = 'scoped memory for tpu_custom_call.1']
    #allocation4 [shape = 's32[2]{0}', space=sflag, size = 0x8, scoped, tag = 'scoped memory for tpu_custom_call.1']
    #allocation5 [shape = 'u8[65536]{0}', space=vmem, size = 0x10000, scoped, tag = 'input window, operand 3, single buffered']
    #allocation6 [shape = 's32[1]{0}', space=sflag, size = 0x4, scoped, tag = 'scoped memory for tpu_custom_call.1']
    #allocation7 [shape = 'u8[65536]{0}', space=vmem, size = 0x10000, scoped, tag = 'input window, operand 7, single buffered']
    #allocation8 [shape = 'u8[16384]{0}', space=vmem, size = 0x4000, scoped, tag = 'output window, operand 0']
    %14 = vsyncpa [#allocation3], 0
    %s15 = scalar_lea.sflag [#allocation3], 1
    %16 = vsyncpa %s15, 0
    %17 = vsyncpa [#allocation6], 0
    %18 = vsyncpa [#allocation4], 0
    %s19 = scalar_lea.sflag [#allocation4], 1
    %20 = vsyncpa %s19, 0
    loop: start=0, step=1, limit=4
    $region2: #{tpu_custom_call.1} parent=1 // loop_pre_header
      _
    $region3: #{tpu_custom_call.1} parent=1 // loop_header
      %s22 = sphi 0, %s26
      %p23 = scmp.ge.s32.totalorder %s22, 4
      %s32 = sphi 0, %s34
      %s35 = sphi 0, %s32
      %s36 = sphi 0, %s35
      %s52 = sphi 0, %s36
      %s58 = sphi 0, %s60
      %s61 = sphi 0, %s58
      %s62 = sphi 0, %s61
      %s78 = sphi 0, %s62
      %s84 = sphi 0, %s86
      %s87 = sphi 0, %s84
      %s88 = sphi 0, %s87
      %s104 = sphi 0, %s88
      %s108 = sphi 0, %s108
      %s110 = sphi 0, %s108
      %s111 = sphi 0, %s110
      %s125 = sphi 0, %s111
      %s129 = sphi 0, %s129
      %s131 = sphi 0, %s129
      %s132 = sphi 0, %s131
      %s146 = sphi 0, %s132
      %s150 = sphi 0, %s150
      %s152 = sphi 0, %s150
      %s153 = sphi 0, %s152
      %s167 = sphi 0, %s153
      %s171 = sphi 0, %s171
      %s173 = sphi 0, %s171
      %s174 = sphi 0, %s173
      %s188 = sphi 0, %s174
      %s192 = sphi 0, %s192
      %s194 = sphi 0, %s192
      %s195 = sphi 0, %s194
      %s209 = sphi 0, %s195
      %s213 = sphi 0, %s213
      %s215 = sphi 0, %s213
      %s216 = sphi 0, %s215
      %s230 = sphi 0, %s216
      %s236 = sphi 0, %s238
      %s239 = sphi 0, %s236
      %s240 = sphi 0, %s239
      %s256 = sphi 0, %s240
    $region4: #{tpu_custom_call.1} parent=1 // loop_header_branch
      %25 = sbr.rel (%p23) target = $region8
    $region5: #{tpu_custom_call.1} parent=1 // loop_body
      %s27 = ssub.s32 %s22, 1
      %s28 = ssub.s32 %s22, 2
      %s29 = sadd.s32 %s22, 1
      %s30 = ssub.s32 %s22, %s29
      %p31 = scmp.eq.s32.totalorder %s30, 0
      %s33 = sadd.s32 %s32, 1
      %s34 = scalar_select %p31, %s32, %s33
      %p37 = pneg %p31
      %p38 = scmp.eq.s32.totalorder %s22, 1
      %p39 = por %p37, %p38
      %p40 = scmp.ne.s32.totalorder %s32, %s35
      %p41 = scmp.eq.s32.totalorder %s22, 0
      %p42 = por %p40, %p41
      %p43 = scmp.ne.s32.totalorder %s32, %s35
      %p44 = scmp.eq.s32.totalorder %s27, 1
      %p45 = por %p43, %p44
      %p46 = scmp.ne.s32.totalorder %s35, %s36
      %p47 = scmp.eq.s32.totalorder %s27, 0
      %p48 = por %p46, %p47
      %p49 = scmp.ne.s32.totalorder %s35, %s36
      %p50 = scmp.eq.s32.totalorder %s28, 1
      %p51 = por %p49, %p50
      %p53 = scmp.ne.s32.totalorder %s36, %s52
      %p54 = scmp.eq.s32.totalorder %s28, 0
      %p55 = por %p53, %p54
      %s56 = ssub.s32 %s22, %s29
      %p57 = scmp.eq.s32.totalorder %s56, 0
      %s59 = sadd.s32 %s58, 1
      %s60 = scalar_select %p57, %s58, %s59
      %p63 = pneg %p57
      %p64 = scmp.eq.s32.totalorder %s22, 1
      %p65 = por %p63, %p64
      %p66 = scmp.ne.s32.totalorder %s58, %s61
      %p67 = scmp.eq.s32.totalorder %s22, 0
      %p68 = por %p66, %p67
      %p69 = scmp.ne.s32.totalorder %s58, %s61
      %p70 = scmp.eq.s32.totalorder %s27, 1
      %p71 = por %p69, %p70
      %p72 = scmp.ne.s32.totalorder %s61, %s62
      %p73 = scmp.eq.s32.totalorder %s27, 0
      %p74 = por %p72, %p73
      %p75 = scmp.ne.s32.totalorder %s61, %s62
      %p76 = scmp.eq.s32.totalorder %s28, 1
      %p77 = por %p75, %p76
      %p79 = scmp.ne.s32.totalorder %s62, %s78
      %p80 = scmp.eq.s32.totalorder %s28, 0
      %p81 = por %p79, %p80
      %s82 = ssub.s32 %s22, %s29
      %p83 = scmp.eq.s32.totalorder %s82, 0
      %s85 = sadd.s32 %s84, 1
      %s86 = scalar_select %p83, %s84, %s85
      %p89 = pneg %p83
      %p90 = scmp.eq.s32.totalorder %s22, 1
      %p91 = por %p89, %p90
      %p92 = scmp.ne.s32.totalorder %s84, %s87
      %p93 = scmp.eq.s32.totalorder %s22, 0
      %p94 = por %p92, %p93
      %p95 = scmp.ne.s32.totalorder %s84, %s87
      %p96 = scmp.eq.s32.totalorder %s27, 1
      %p97 = por %p95, %p96
      %p98 = scmp.ne.s32.totalorder %s87, %s88
      %p99 = scmp.eq.s32.totalorder %s27, 0
      %p100 = por %p98, %p99
      %p101 = scmp.ne.s32.totalorder %s87, %s88
      %p102 = scmp.eq.s32.totalorder %s28, 1
      %p103 = por %p101, %p102
      %p105 = scmp.ne.s32.totalorder %s88, %s104
      %p106 = scmp.eq.s32.totalorder %s28, 0
      %p107 = por %p105, %p106
      %s109 = sadd.s32 %s108, 1
      %p112 = scmp.eq.s32.totalorder %s22, 1
      %p113 = scmp.ne.s32.totalorder %s108, %s110
      %p114 = scmp.eq.s32.totalorder %s22, 0
      %p115 = por %p113, %p114
      %p116 = scmp.ne.s32.totalorder %s108, %s110
      %p117 = scmp.eq.s32.totalorder %s27, 1
      %p118 = por %p116, %p117
      %p119 = scmp.ne.s32.totalorder %s110, %s111
      %p120 = scmp.eq.s32.totalorder %s27, 0
      %p121 = por %p119, %p120
      %p122 = scmp.ne.s32.totalorder %s110, %s111
      %p123 = scmp.eq.s32.totalorder %s28, 1
      %p124 = por %p122, %p123
      %p126 = scmp.ne.s32.totalorder %s111, %s125
      %p127 = scmp.eq.s32.totalorder %s28, 0
      %p128 = por %p126, %p127
      %s130 = sadd.s32 %s129, 1
      %p133 = scmp.eq.s32.totalorder %s22, 1
      %p134 = scmp.ne.s32.totalorder %s129, %s131
      %p135 = scmp.eq.s32.totalorder %s22, 0
      %p136 = por %p134, %p135
      %p137 = scmp.ne.s32.totalorder %s129, %s131
      %p138 = scmp.eq.s32.totalorder %s27, 1
      %p139 = por %p137, %p138
      %p140 = scmp.ne.s32.totalorder %s131, %s132
      %p141 = scmp.eq.s32.totalorder %s27, 0
      %p142 = por %p140, %p141
      %p143 = scmp.ne.s32.totalorder %s131, %s132
      %p144 = scmp.eq.s32.totalorder %s28, 1
      %p145 = por %p143, %p144
      %p147 = scmp.ne.s32.totalorder %s132, %s146
      %p148 = scmp.eq.s32.totalorder %s28, 0
      %p149 = por %p147, %p148
      %s151 = sadd.s32 %s150, 1
      %p154 = scmp.eq.s32.totalorder %s22, 1
      %p155 = scmp.ne.s32.totalorder %s150, %s152
      %p156 = scmp.eq.s32.totalorder %s22, 0
      %p157 = por %p155, %p156
      %p158 = scmp.ne.s32.totalorder %s150, %s152
      %p159 = scmp.eq.s32.totalorder %s27, 1
      %p160 = por %p158, %p159
      %p161 = scmp.ne.s32.totalorder %s152, %s153
      %p162 = scmp.eq.s32.totalorder %s27, 0
      %p163 = por %p161, %p162
      %p164 = scmp.ne.s32.totalorder %s152, %s153
      %p165 = scmp.eq.s32.totalorder %s28, 1
      %p166 = por %p164, %p165
      %p168 = scmp.ne.s32.totalorder %s153, %s167
      %p169 = scmp.eq.s32.totalorder %s28, 0
      %p170 = por %p168, %p169
      %s172 = sadd.s32 %s171, 1
      %p175 = scmp.eq.s32.totalorder %s22, 1
      %p176 = scmp.ne.s32.totalorder %s171, %s173
      %p177 = scmp.eq.s32.totalorder %s22, 0
      %p178 = por %p176, %p177
      %p179 = scmp.ne.s32.totalorder %s171, %s173
      %p180 = scmp.eq.s32.totalorder %s27, 1
      %p181 = por %p179, %p180
      %p182 = scmp.ne.s32.totalorder %s173, %s174
      %p183 = scmp.eq.s32.totalorder %s27, 0
      %p184 = por %p182, %p183
      %p185 = scmp.ne.s32.totalorder %s173, %s174
      %p186 = scmp.eq.s32.totalorder %s28, 1
      %p187 = por %p185, %p186
      %p189 = scmp.ne.s32.totalorder %s174, %s188
      %p190 = scmp.eq.s32.totalorder %s28, 0
      %p191 = por %p189, %p190
      %s193 = sadd.s32 %s192, 1
      %p196 = scmp.eq.s32.totalorder %s22, 1
      %p197 = scmp.ne.s32.totalorder %s192, %s194
      %p198 = scmp.eq.s32.totalorder %s22, 0
      %p199 = por %p197, %p198
      %p200 = scmp.ne.s32.totalorder %s192, %s194
      %p201 = scmp.eq.s32.totalorder %s27, 1
      %p202 = por %p200, %p201
      %p203 = scmp.ne.s32.totalorder %s194, %s195
      %p204 = scmp.eq.s32.totalorder %s27, 0
      %p205 = por %p203, %p204
      %p206 = scmp.ne.s32.totalorder %s194, %s195
      %p207 = scmp.eq.s32.totalorder %s28, 1
      %p208 = por %p206, %p207
      %p210 = scmp.ne.s32.totalorder %s195, %s209
      %p211 = scmp.eq.s32.totalorder %s28, 0
      %p212 = por %p210, %p211
      %s214 = sadd.s32 %s213, 1
      %p217 = scmp.eq.s32.totalorder %s22, 1
      %p218 = scmp.ne.s32.totalorder %s213, %s215
      %p219 = scmp.eq.s32.totalorder %s22, 0
      %p220 = por %p218, %p219
      %p221 = scmp.ne.s32.totalorder %s213, %s215
      %p222 = scmp.eq.s32.totalorder %s27, 1
      %p223 = por %p221, %p222
      %p224 = scmp.ne.s32.totalorder %s215, %s216
      %p225 = scmp.eq.s32.totalorder %s27, 0
      %p226 = por %p224, %p225
      %p227 = scmp.ne.s32.totalorder %s215, %s216
      %p228 = scmp.eq.s32.totalorder %s28, 1
      %p229 = por %p227, %p228
      %p231 = scmp.ne.s32.totalorder %s216, %s230
      %p232 = scmp.eq.s32.totalorder %s28, 0
      %p233 = por %p231, %p232
      %s234 = ssub.s32 %s22, %s29
      %p235 = scmp.eq.s32.totalorder %s234, 0
      %s237 = sadd.s32 %s236, 1
      %s238 = scalar_select %p235, %s236, %s237
      %p241 = pneg %p235
      %p242 = scmp.eq.s32.totalorder %s22, 1
      %p243 = por %p241, %p242
      %p244 = scmp.ne.s32.totalorder %s236, %s239
      %p245 = scmp.eq.s32.totalorder %s22, 0
      %p246 = por %p244, %p245
      %p247 = scmp.ne.s32.totalorder %s236, %s239
      %p248 = scmp.eq.s32.totalorder %s27, 1
      %p249 = por %p247, %p248
      %p250 = scmp.ne.s32.totalorder %s239, %s240
      %p251 = scmp.eq.s32.totalorder %s27, 0
      %p252 = por %p250, %p251
      %p253 = scmp.ne.s32.totalorder %s239, %s240
      %p254 = scmp.eq.s32.totalorder %s28, 1
      %p255 = por %p253, %p254
      %p257 = scmp.ne.s32.totalorder %s240, %s256
      %p258 = scmp.eq.s32.totalorder %s28, 0
      %p259 = por %p257, %p258
      %p260 = scmp.le.s32.totalorder 1, %s22
      %p261 = scmp.lt.s32.totalorder %s22, 3
      %p262 = pnand %p260, %p261
      %p263 = pneg %p262
      // Predicated region
      $region9: #{tpu_custom_call.1} parent=5 // pred_check
        _
      $region10: #{tpu_custom_call.1} parent=5 // pred_check_branch
        %265 = sbr.rel (%p262) target = $region12
      $region11: #{tpu_custom_call.1} parent=5 // pred_region
        %s266 = ssub.s32 %s22, 1
        // Predicated region
        $region13: #{tpu_custom_call.1} parent=11 // pred_check
          %p267 = pneg %p121
        $region14: #{tpu_custom_call.1} parent=11 // pred_check_branch
          %269 = sbr.rel (%p267) target = $region16
        $region15: #{tpu_custom_call.1} parent=11 // pred_region
          %s271 = ssub.s32 2048, 2048
          %272 = vsyncadd [#allocation6], %s271
          %s273 = sshll.u32 [#allocation5], 4
          %s274 = int_to_ptr.vmem [resolvable:$true] %s273
          %279 = dma.hbm_to_vmem [thread:$0]  %s3, 2048, %s274, [#allocation6], 128, 128, 8
        $region16: #{tpu_custom_call.1} parent=11 // pred_fallthru
          _
        // Predicated region
        $region17: #{tpu_custom_call.1} parent=11 // pred_check
          %p280 = pneg %p142
        $region18: #{tpu_custom_call.1} parent=11 // pred_check_branch
          %282 = sbr.rel (%p280) target = $region20
        $region19: #{tpu_custom_call.1} parent=11 // pred_region
          _
        $region20: #{tpu_custom_call.1} parent=11 // pred_fallthru
          _
        // Predicated region
        $region21: #{tpu_custom_call.1} parent=11 // pred_check
          %p283 = pneg %p163
        $region22: #{tpu_custom_call.1} parent=11 // pred_check_branch
          %285 = sbr.rel (%p283) target = $region24
        $region23: #{tpu_custom_call.1} parent=11 // pred_region
          _
        $region24: #{tpu_custom_call.1} parent=11 // pred_fallthru
          _
        // Predicated region
        $region25: #{tpu_custom_call.1} parent=11 // pred_check
          %p286 = pneg %p184
        $region26: #{tpu_custom_call.1} parent=11 // pred_check_branch
          %288 = sbr.rel (%p286) target = $region28
        $region27: #{tpu_custom_call.1} parent=11 // pred_region
          _
        $region28: #{tpu_custom_call.1} parent=11 // pred_fallthru
          _
        // Predicated region
        $region29: #{tpu_custom_call.1} parent=11 // pred_check
          %p289 = pneg %p205
        $region30: #{tpu_custom_call.1} parent=11 // pred_check_branch
          %291 = sbr.rel (%p289) target = $region32
        $region31: #{tpu_custom_call.1} parent=11 // pred_region
          %s293 = ssub.s32 2048, 2048
          %294 = vsyncadd [#allocation6], %s293
          %s295 = sshll.u32 [#allocation7], 4
          %s296 = int_to_ptr.vmem [resolvable:$true] %s295
          %301 = dma.hbm_to_vmem [thread:$0]  %s7, 2048, %s296, [#allocation6], 128, 128, 8
        $region32: #{tpu_custom_call.1} parent=11 // pred_fallthru
          _
        // Predicated region
        $region33: #{tpu_custom_call.1} parent=11 // pred_check
          %p302 = pneg %p226
        $region34: #{tpu_custom_call.1} parent=11 // pred_check_branch
          %304 = sbr.rel (%p302) target = $region36
        $region35: #{tpu_custom_call.1} parent=11 // pred_region
          _
        $region36: #{tpu_custom_call.1} parent=11 // pred_fallthru
          _
      $region12: #{tpu_custom_call.1} parent=5 // pred_fallthru
        _
      %p305 = scmp.lt.s32.totalorder %s22, 2
      // Predicated region
      $region37: #{tpu_custom_call.1} parent=5 // pred_check
        %p306 = pneg %p305
      $region38: #{tpu_custom_call.1} parent=5 // pred_check_branch
        %308 = sbr.rel (%p306) target = $region40
      $region39: #{tpu_custom_call.1} parent=5 // pred_region
        // Predicated region
        $region41: #{tpu_custom_call.1} parent=39 // pred_check
          %p309 = pneg %p42
        $region42: #{tpu_custom_call.1} parent=39 // pred_check_branch
          %311 = sbr.rel (%p309) target = $region44
        $region43: #{tpu_custom_call.1} parent=39 // pred_region
          %s312 = smul.u32 2, %s22
          %p313 = scmp.lt.s32.totalorder %s312, 3
          %s314 = scalar_select %p313, %s312, 3
          %s315 = smul.addr %s314, 4
          %s316 = scalar_lea.vmem %s0, %s315
          %s317 = smul.u32 2, %s22
        $region44: #{tpu_custom_call.1} parent=39 // pred_fallthru
          _
        // Predicated region
        $region45: #{tpu_custom_call.1} parent=39 // pred_check
          %p318 = pneg %p68
        $region46: #{tpu_custom_call.1} parent=39 // pred_check_branch
          %320 = sbr.rel (%p318) target = $region48
        $region47: #{tpu_custom_call.1} parent=39 // pred_region
          %s321 = smul.u32 2, %s22
          %p322 = scmp.lt.s32.totalorder %s321, 3
          %s323 = scalar_select %p322, %s321, 3
          %s324 = smul.addr %s323, 4
          %s325 = scalar_lea.vmem %s1, %s324
          %s326 = smul.u32 2, %s22
        $region48: #{tpu_custom_call.1} parent=39 // pred_fallthru
          _
        // Predicated region
        $region49: #{tpu_custom_call.1} parent=39 // pred_check
          %p327 = pneg %p94
        $region50: #{tpu_custom_call.1} parent=39 // pred_check_branch
          %329 = sbr.rel (%p327) target = $region52
        $region51: #{tpu_custom_call.1} parent=39 // pred_region
          %s330 = sand.u32 %s84, 1
          %s331 = scalar_lea.sflag [#allocation3], %s330
          %s332 = sand.u32 %s84, 1
          %s333 = smul.addr %s332, 8
          %s334 = scalar_lea.vmem [#allocation2], %s333
          %s335 = smul.u32 2, %s22
          %s337 = ssub.s32 128, 128
          %338 = vsyncadd %s331, %s337
          %s339 = smul.addr %s335, 64
          %s340 = scalar_lea.hbm %s2, %s339
          %s341 = sshll.u32 %s334, 4
          %s342 = int_to_ptr.vmem [resolvable:$true] %s341
          %347 = dma.hbm_to_vmem [thread:$0]  %s340, 128, %s342, %s331, 64, 64, 4
        $region52: #{tpu_custom_call.1} parent=39 // pred_fallthru
          _
      $region40: #{tpu_custom_call.1} parent=5 // pred_fallthru
        _
      %p348 = scmp.le.s32.totalorder 1, %s22
      %p349 = scmp.lt.s32.totalorder %s22, 3
      %p350 = pnand %p348, %p349
      %p351 = pneg %p350
      // Predicated region
      $region53: #{tpu_custom_call.1} parent=5 // pred_check
        _
      $region54: #{tpu_custom_call.1} parent=5 // pred_check_branch
        %353 = sbr.rel (%p350) target = $region56
      $region55: #{tpu_custom_call.1} parent=5 // pred_region
        %s354 = ssub.s32 %s22, 1
        %s355 = sand.u32 %s87, 1
        %s356 = scalar_lea.sflag [#allocation3], %s355
        %s357 = sand.u32 %s87, 1
        %s358 = smul.addr %s357, 8
        %s359 = scalar_lea.vmem [#allocation2], %s358
        // Predicated region
        $region57: #{tpu_custom_call.1} parent=55 // pred_check
          %p360 = pneg %p100
        $region58: #{tpu_custom_call.1} parent=55 // pred_check_branch
          %362 = sbr.rel (%p360) target = $region60
        $region59: #{tpu_custom_call.1} parent=55 // pred_region
          %363 = dma.done %s356, 128
        $region60: #{tpu_custom_call.1} parent=55 // pred_fallthru
          _
        // Predicated region
        $region61: #{tpu_custom_call.1} parent=55 // pred_check
          %p364 = pneg %p121
        $region62: #{tpu_custom_call.1} parent=55 // pred_check_branch
          %366 = sbr.rel (%p364) target = $region64
        $region63: #{tpu_custom_call.1} parent=55 // pred_region
          %367 = dma.done [#allocation6], 2048
        $region64: #{tpu_custom_call.1} parent=55 // pred_fallthru
          _
        // Predicated region
        $region65: #{tpu_custom_call.1} parent=55 // pred_check
          %p368 = pneg %p205
        $region66: #{tpu_custom_call.1} parent=55 // pred_check_branch
          %370 = sbr.rel (%p368) target = $region68
        $region67: #{tpu_custom_call.1} parent=55 // pred_region
          %371 = dma.done [#allocation6], 2048
        $region68: #{tpu_custom_call.1} parent=55 // pred_fallthru
          _
        %s372 = smul.u32 2, %s27
        %p373 = scmp.lt.s32.totalorder %s372, 3
        %s374 = scalar_select %p373, %s372, 3
        %s375 = smul.addr %s374, 4
        %s376 = scalar_lea.vmem %s0, %s375
        %p377 = pneg %p48
        %p378 = pneg %p45
        %s379 = smul.u32 2, %s27
        %p380 = scmp.lt.s32.totalorder %s379, 3
        %s381 = scalar_select %p380, %s379, 3
        %s382 = smul.addr %s381, 4
        %s383 = scalar_lea.vmem %s1, %s382
        %p384 = pneg %p74
        %p385 = pneg %p71
        %s386 = sand.u32 %s87, 1
        %s387 = scalar_lea.sflag [#allocation3], %s386
        %s388 = sand.u32 %s87, 1
        %s389 = smul.addr %s388, 8
        %s390 = scalar_lea.vmem [#allocation2], %s389
        %p391 = pneg %p100
        %p392 = pneg %p97
        %p393 = pneg %p121
        %p394 = pneg %p118
        %p395 = pneg %p142
        %p396 = pneg %p139
        %p397 = pneg %p163
        %p398 = pneg %p160
        %p399 = pneg %p184
        %p400 = pneg %p181
        %p401 = pneg %p205
        %p402 = pneg %p202
        %p403 = pneg %p226
        %p404 = pneg %p223
        %p405 = pneg %p252
        %p406 = pneg %p249
        %s407 = sand.u32 %s239, 1
        %s408 = scalar_lea.sflag [#allocation4], %s407
        %s409 = sand.u32 %s239, 1
        %s410 = smul.addr %s409, 16
        %s411 = scalar_lea.vmem [#allocation8], %s410
        %s412 = smul.u32 2, %s27
        %p413 = scmp.lt.s32.totalorder %s412, 3
        %s414 = scalar_select %p413, %s412, 3
        %s415 = smul.addr %s414, 4
        %s416 = scalar_lea.vmem %s0, %s415
        %s417 = smul.u32 2, %s27
        %s418 = smul.u32 2, %s27
        %p419 = scmp.lt.s32.totalorder %s418, 3
        %s420 = scalar_select %p419, %s418, 3
        %s421 = smul.addr %s420, 4
        %s422 = scalar_lea.vmem %s1, %s421
        %s423 = smul.u32 2, %s27
        %s424 = smul.u32 2, %s27
        %s425 = smul.u32 2, %s27
        %v427 = vld [vmem:[%s416] sm:$0xf]
        %v428 = vld [vmem:[%s416 + $0x4] sm:$0xf]
        %v429 = vld [vmem:[%s422] sm:$0xf]
        %v430 = vld [vmem:[%s422 + $0x4] sm:$0xf]
        %v431 = vld [vmem:[%s359] sm:$0xf]
        %v432 = vld [vmem:[%s359 + $0x4] sm:$0xf]
        %v433 = vunpack.c.l.bf16 %v431
        %v434 = vunpack.c.l.bf16 %v432
        %v435 = vld [vmem:[#allocation5] sm:$0xff]
        %v436 = vld [vmem:[#allocation5 + $0x8] sm:$0xff]
        %v437 = vld [vmem:[#allocation5 + $0x10] sm:$0xff]
        %v438 = vld [vmem:[#allocation5 + $0x18] sm:$0xff]
        %v439 = vld [vmem:[#allocation5 + $0x20] sm:$0xff]
        %v440 = vld [vmem:[#allocation5 + $0x28] sm:$0xff]
        %v441 = vld [vmem:[#allocation5 + $0x30] sm:$0xff]
        %v442 = vld [vmem:[#allocation5 + $0x38] sm:$0xff]
        %v443 = vld [vmem:[#allocation5 + $0x40] sm:$0xff]
        %v444 = vld [vmem:[#allocation5 + $0x48] sm:$0xff]
        %v445 = vld [vmem:[#allocation5 + $0x50] sm:$0xff]
        %v446 = vld [vmem:[#allocation5 + $0x58] sm:$0xff]
        %v447 = vld [vmem:[#allocation5 + $0x60] sm:$0xff]
        %v448 = vld [vmem:[#allocation5 + $0x68] sm:$0xff]
        %v449 = vld [vmem:[#allocation5 + $0x70] sm:$0xff]
        %v450 = vld [vmem:[#allocation5 + $0x78] sm:$0xff]
        %v451 = vld [vmem:[%s4] sm:$0x3]
        %v453 = vlaneseq
        %v454 = vshrl.u32 %v453, 7
        %v455 = vsub.s32 0, %v454
        %v456 = vrot.slane %v451, %v455
        %v457 = vlaneseq
        %v458 = vshrl.u32 %v457, 7
        %v459 = vsub.s32 1, %v458
        %v460 = vrot.slane %v451, %v459
        %v465 = vunpack.c.l.b16 %v427
        %v466 = vunpack.c.l.b16 %v428
        %v467 = vpack.c.b16 %v466, %v465
        %v485 = vunpack.c.l.b16 %v435
        %v486 = vunpack.c.h.b16 %v435
        %v487 = vunpack.c.l.b16 %v436
        %v488 = vunpack.c.h.b16 %v436
        %v489 = vunpack.c.l.b16 %v437
        %v490 = vunpack.c.h.b16 %v437
        %v491 = vunpack.c.l.b16 %v438
        %v492 = vunpack.c.h.b16 %v438
        %v493 = vunpack.c.l.b16 %v439
        %v494 = vunpack.c.h.b16 %v439
        %v495 = vunpack.c.l.b16 %v440
        %v496 = vunpack.c.h.b16 %v440
        %v497 = vunpack.c.l.b16 %v441
        %v498 = vunpack.c.h.b16 %v441
        %v499 = vunpack.c.l.b16 %v442
        %v500 = vunpack.c.h.b16 %v442
        %v501 = vunpack.c.l.b16 %v443
        %v502 = vunpack.c.h.b16 %v443
        %v503 = vunpack.c.l.b16 %v444
        %v504 = vunpack.c.h.b16 %v444
        %v505 = vunpack.c.l.b16 %v445
        %v506 = vunpack.c.h.b16 %v445
        %v507 = vunpack.c.l.b16 %v446
        %v508 = vunpack.c.h.b16 %v446
        %v509 = vunpack.c.l.b16 %v447
        %v510 = vunpack.c.h.b16 %v447
        %v511 = vunpack.c.l.b16 %v448
        %v512 = vunpack.c.h.b16 %v448
        %v513 = vunpack.c.l.b16 %v449
        %v514 = vunpack.c.h.b16 %v449
        %v515 = vunpack.c.l.b16 %v450
        %v516 = vunpack.c.h.b16 %v450
        %v517 = vpack.c.b16 %v487, %v485
        %v518 = vpack.c.b16 %v488, %v486
        %v519 = vpack.c.b16 %v491, %v489
        %v520 = vpack.c.b16 %v492, %v490
        %v521 = vpack.c.b16 %v495, %v493
        %v522 = vpack.c.b16 %v496, %v494
        %v523 = vpack.c.b16 %v499, %v497
        %v524 = vpack.c.b16 %v500, %v498
        %v525 = vpack.c.b16 %v503, %v501
        %v526 = vpack.c.b16 %v504, %v502
        %v527 = vpack.c.b16 %v507, %v505
        %v528 = vpack.c.b16 %v508, %v506
        %v529 = vpack.c.b16 %v511, %v509
        %v530 = vpack.c.b16 %v512, %v510
        %v531 = vpack.c.b16 %v515, %v513
        %v532 = vpack.c.b16 %v516, %v514
        %549 = vmatprep.subr.bf16.mxu0 %v518
        %550 = vmatpush1.bf16.msra.mxu0 %v517
        %551 = vmatprep.subr.bf16.mxu0 %v520
        %552 = vmatpush1.bf16.msra.mxu0 %v519
        %553 = vmatprep.subr.bf16.mxu0 %v522
        %554 = vmatpush1.bf16.msra.mxu0 %v521
        %555 = vmatprep.subr.bf16.mxu0 %v524
        %556 = vmatpush1.bf16.msra.mxu0 %v523
        %557 = vmatprep.subr.bf16.mxu0 %v526
        %558 = vmatpush1.bf16.msra.mxu0 %v525
        %559 = vmatprep.subr.bf16.mxu0 %v528
        %560 = vmatpush1.bf16.msra.mxu0 %v527
        %561 = vmatprep.subr.bf16.mxu0 %v530
        %562 = vmatpush1.bf16.msra.mxu0 %v529
        %563 = vmatprep.subr.bf16.mxu0 %v532
        %564 = vmatpush1.bf16.msra.mxu0 %v531
        %565 = vmatprep.subr.bf16.mxu0 0
        %566 = vmatpush1.bf16.msra.mxu0 0
        %567 = vmatprep.subr.bf16.mxu0 0
        %568 = vmatpush1.bf16.msra.mxu0 0
        %569 = vmatprep.subr.bf16.mxu0 0
        %570 = vmatpush1.bf16.msra.mxu0 0
        %571 = vmatprep.subr.bf16.mxu0 0
        %572 = vmatpush1.bf16.msra.mxu0 0
        %573 = vmatprep.subr.bf16.mxu0 0
        %574 = vmatpush1.bf16.msra.mxu0 0
        %575 = vmatprep.subr.bf16.mxu0 0
        %576 = vmatpush1.bf16.msra.mxu0 0
        %577 = vmatprep.subr.bf16.mxu0 0
        %578 = vmatpush1.bf16.msra.mxu0 0
        %579 = vmatprep.subr.bf16.mxu0 0
        %580 = vmatpush1.bf16.msra.mxu0 0
        %581 = vmatprep.mubr.bf16.mxu0 0
        %582 = vmatmul.mubr.bf16.gmra.mrb[0].mxu0 %v467
        %v583 = vpop.f32.mrb[0].mxu0
        %v584 = vadd.f32 %v456, %v583
        %v585 = vpop.f32.mrb[0].mxu0
        %v586 = vadd.f32 %v460, %v585
        %v587 = vpop.f32.mrb[0].mxu0
        %v588 = vadd.f32 %v456, %v587
        %v589 = vpop.f32.mrb[0].mxu0
        %v590 = vadd.f32 %v460, %v589
        %591 = vdwg.mxu0
        %v592 = vsub.f32 0.0, %v586
        %v593 = vsub.f32 0.0, %v590
        %v594 = vmul.f32 %v592, 1.442695
        %v595 = vpow.pop %v594
        %v596 = vmul.f32 %v593, 1.442695
        %v597 = vpow.pop %v596
        %v598 = vadd.f32 %v595, 1.0
        %v599 = vadd.f32 %v597, 1.0
        %v600 = vrcp.pop %v598
        %v601 = vrcp.pop %v599
        %v602 = vld [vmem:[%s5] sm:$0xf]
        %v603 = vld [vmem:[%s6] sm:$0x1]
        %v605 = vlaneseq
        %v606 = vshrl.u32 %v605, 7
        %v607 = vsub.s32 0, %v606
        %v608 = vrot.slane %v603, %v607
        %v612 = vunpack.c.l.b16 %v429
        %v613 = vunpack.c.l.b16 %v430
        %v614 = vpack.c.b16 %v613, %v612
        %vm615 = vcmask 64512
        %v617 = vsel %vm615, %v614, 0
        %vm619 = vcmask 1043456
        %v621 = vsel %vm619, %v602, 0
        %623 = vmatprep.subr.bf16.mxu0 0
        %624 = vmatpush1.bf16.msra.mxu0 %v621
        %625 = vmatprep.subr.bf16.mxu0 0
        %626 = vmatpush1.bf16.msra.mxu0 0
        %627 = vmatprep.subr.bf16.mxu0 0
        %628 = vmatpush1.bf16.msra.mxu0 0
        %629 = vmatprep.subr.bf16.mxu0 0
        %630 = vmatpush1.bf16.msra.mxu0 0
        %631 = vmatprep.subr.bf16.mxu0 0
        %632 = vmatpush1.bf16.msra.mxu0 0
        %633 = vmatprep.subr.bf16.mxu0 0
        %634 = vmatpush1.bf16.msra.mxu0 0
        %635 = vmatprep.subr.bf16.mxu0 0
        %636 = vmatpush1.bf16.msra.mxu0 0
        %637 = vmatprep.subr.bf16.mxu0 0
        %638 = vmatpush1.bf16.msra.mxu0 0
        %639 = vmatprep.subr.bf16.mxu0 0
        %640 = vmatpush1.bf16.msra.mxu0 0
        %641 = vmatprep.subr.bf16.mxu0 0
        %642 = vmatpush1.bf16.msra.mxu0 0
        %643 = vmatprep.subr.bf16.mxu0 0
        %644 = vmatpush1.bf16.msra.mxu0 0
        %645 = vmatprep.subr.bf16.mxu0 0
        %646 = vmatpush1.bf16.msra.mxu0 0
        %647 = vmatprep.subr.bf16.mxu0 0
        %648 = vmatpush1.bf16.msra.mxu0 0
        %649 = vmatprep.subr.bf16.mxu0 0
        %650 = vmatpush1.bf16.msra.mxu0 0
        %651 = vmatprep.subr.bf16.mxu0 0
        %652 = vmatpush1.bf16.msra.mxu0 0
        %653 = vmatprep.subr.bf16.mxu0 0
        %654 = vmatpush1.bf16.msra.mxu0 0
        %655 = vmatprep.mubr.bf16.mxu0 0
        %656 = vmatmul.mubr.bf16.gmra.mrb[0].mxu0 %v617
        %v657 = vpop.f32.mrb[0].mxu0
        %v658 = vadd.f32 %v608, %v657
        %v659 = vpop.f32.mrb[0].mxu0
        %v660 = vpop.f32.mrb[0].mxu0
        %v661 = vadd.f32 %v608, %v660
        %v662 = vpop.f32.mrb[0].mxu0
        %663 = vdwg.mxu0
        %v664 = vsub.f32 1.0, %v600
        %v665 = vsub.f32 1.0, %v601
        %v666 = vsub.f32 %v584, %v433
        %v667 = vsub.f32 %v588, %v434
        %v668 = vmul.f32 %v664, %v666
        %v669 = vmul.f32 %v665, %v667
        %v670 = vmul.f32 %v668, %v658
        %v671 = vmul.f32 %v669, %v661
        %v672 = vmax.f32 %v670, 0.0
        %v673 = vmax.f32 %v671, 0.0
        %v674 = vpack.c.bf16 %v673, %v672
        %v675 = vld [vmem:[#allocation7] sm:$0xff]
        %v676 = vld [vmem:[#allocation7 + $0x8] sm:$0xff]
        %v677 = vld [vmem:[#allocation7 + $0x10] sm:$0xff]
        %v678 = vld [vmem:[#allocation7 + $0x18] sm:$0xff]
        %v679 = vld [vmem:[#allocation7 + $0x20] sm:$0xff]
        %v680 = vld [vmem:[#allocation7 + $0x28] sm:$0xff]
        %v681 = vld [vmem:[#allocation7 + $0x30] sm:$0xff]
        %v682 = vld [vmem:[#allocation7 + $0x38] sm:$0xff]
        %v683 = vld [vmem:[#allocation7 + $0x40] sm:$0xff]
        %v684 = vld [vmem:[#allocation7 + $0x48] sm:$0xff]
        %v685 = vld [vmem:[#allocation7 + $0x50] sm:$0xff]
        %v686 = vld [vmem:[#allocation7 + $0x58] sm:$0xff]
        %v687 = vld [vmem:[#allocation7 + $0x60] sm:$0xff]
        %v688 = vld [vmem:[#allocation7 + $0x68] sm:$0xff]
        %v689 = vld [vmem:[#allocation7 + $0x70] sm:$0xff]
        %v690 = vld [vmem:[#allocation7 + $0x78] sm:$0xff]
        %v691 = vld [vmem:[%s8] sm:$0x3]
        %v693 = vlaneseq
        %v694 = vshrl.u32 %v693, 7
        %v695 = vsub.s32 0, %v694
        %v696 = vrot.slane %v691, %v695
        %v697 = vlaneseq
        %v698 = vshrl.u32 %v697, 7
        %v699 = vsub.s32 1, %v698
        %v700 = vrot.slane %v691, %v699
        %v719 = vunpack.c.l.b16 %v675
        %v720 = vunpack.c.h.b16 %v675
        %v721 = vunpack.c.l.b16 %v676
        %v722 = vunpack.c.h.b16 %v676
        %v723 = vunpack.c.l.b16 %v677
        %v724 = vunpack.c.h.b16 %v677
        %v725 = vunpack.c.l.b16 %v678
        %v726 = vunpack.c.h.b16 %v678
        %v727 = vunpack.c.l.b16 %v679
        %v728 = vunpack.c.h.b16 %v679
        %v729 = vunpack.c.l.b16 %v680
        %v730 = vunpack.c.h.b16 %v680
        %v731 = vunpack.c.l.b16 %v681
        %v732 = vunpack.c.h.b16 %v681
        %v733 = vunpack.c.l.b16 %v682
        %v734 = vunpack.c.h.b16 %v682
        %v735 = vunpack.c.l.b16 %v683
        %v736 = vunpack.c.h.b16 %v683
        %v737 = vunpack.c.l.b16 %v684
        %v738 = vunpack.c.h.b16 %v684
        %v739 = vunpack.c.l.b16 %v685
        %v740 = vunpack.c.h.b16 %v685
        %v741 = vunpack.c.l.b16 %v686
        %v742 = vunpack.c.h.b16 %v686
        %v743 = vunpack.c.l.b16 %v687
        %v744 = vunpack.c.h.b16 %v687
        %v745 = vunpack.c.l.b16 %v688
        %v746 = vunpack.c.h.b16 %v688
        %v747 = vunpack.c.l.b16 %v689
        %v748 = vunpack.c.h.b16 %v689
        %v749 = vunpack.c.l.b16 %v690
        %v750 = vunpack.c.h.b16 %v690
        %v751 = vpack.c.b16 %v721, %v719
        %v752 = vpack.c.b16 %v722, %v720
        %v753 = vpack.c.b16 %v725, %v723
        %v754 = vpack.c.b16 %v726, %v724
        %v755 = vpack.c.b16 %v729, %v727
        %v756 = vpack.c.b16 %v730, %v728
        %v757 = vpack.c.b16 %v733, %v731
        %v758 = vpack.c.b16 %v734, %v732
        %v759 = vpack.c.b16 %v737, %v735
        %v760 = vpack.c.b16 %v738, %v736
        %v761 = vpack.c.b16 %v741, %v739
        %v762 = vpack.c.b16 %v742, %v740
        %v763 = vpack.c.b16 %v745, %v743
        %v764 = vpack.c.b16 %v746, %v744
        %v765 = vpack.c.b16 %v749, %v747
        %v766 = vpack.c.b16 %v750, %v748
        %783 = vmatprep.subr.bf16.mxu0 %v752
        %784 = vmatpush1.bf16.msra.mxu0 %v751
        %785 = vmatprep.subr.bf16.mxu0 %v754
        %786 = vmatpush1.bf16.msra.mxu0 %v753
        %787 = vmatprep.subr.bf16.mxu0 %v756
        %788 = vmatpush1.bf16.msra.mxu0 %v755
        %789 = vmatprep.subr.bf16.mxu0 %v758
        %790 = vmatpush1.bf16.msra.mxu0 %v757
        %791 = vmatprep.subr.bf16.mxu0 %v760
        %792 = vmatpush1.bf16.msra.mxu0 %v759
        %793 = vmatprep.subr.bf16.mxu0 %v762
        %794 = vmatpush1.bf16.msra.mxu0 %v761
        %795 = vmatprep.subr.bf16.mxu0 %v764
        %796 = vmatpush1.bf16.msra.mxu0 %v763
        %797 = vmatprep.subr.bf16.mxu0 %v766
        %798 = vmatpush1.bf16.msra.mxu0 %v765
        %799 = vmatprep.subr.bf16.mxu0 0
        %800 = vmatpush1.bf16.msra.mxu0 0
        %801 = vmatprep.subr.bf16.mxu0 0
        %802 = vmatpush1.bf16.msra.mxu0 0
        %803 = vmatprep.subr.bf16.mxu0 0
        %804 = vmatpush1.bf16.msra.mxu0 0
        %805 = vmatprep.subr.bf16.mxu0 0
        %806 = vmatpush1.bf16.msra.mxu0 0
        %807 = vmatprep.subr.bf16.mxu0 0
        %808 = vmatpush1.bf16.msra.mxu0 0
        %809 = vmatprep.subr.bf16.mxu0 0
        %810 = vmatpush1.bf16.msra.mxu0 0
        %811 = vmatprep.subr.bf16.mxu0 0
        %812 = vmatpush1.bf16.msra.mxu0 0
        %813 = vmatprep.subr.bf16.mxu0 0
        %814 = vmatpush1.bf16.msra.mxu0 0
        %815 = vmatprep.mubr.bf16.mxu0 0
        %816 = vmatmul.mubr.bf16.gmra.mrb[0].mxu0 %v674
        %v817 = vpop.f32.mrb[0].mxu0
        %v818 = vadd.f32 %v696, %v817
        %v819 = vpop.f32.mrb[0].mxu0
        %v820 = vadd.f32 %v700, %v819
        %v821 = vpop.f32.mrb[0].mxu0
        %v822 = vadd.f32 %v696, %v821
        %v823 = vpop.f32.mrb[0].mxu0
        %v824 = vadd.f32 %v700, %v823
        %825 = vdwg.mxu0
        %v826 = vsub.f32 0.0, %v820
        %v827 = vsub.f32 0.0, %v824
        %v828 = vmul.f32 %v826, 1.442695
        %v829 = vpow.pop %v828
        %v830 = vmul.f32 %v827, 1.442695
        %v831 = vpow.pop %v830
        %v832 = vadd.f32 %v829, 1.0
        %v833 = vadd.f32 %v831, 1.0
        %v834 = vrcp.pop %v832
        %v835 = vrcp.pop %v833
        %v836 = vmul.f32 %v834, %v818
        %v837 = vmul.f32 %v835, %v822
        %838 = vst [vmem:[%s411] sm:$0xff] %v836
        %839 = vst [vmem:[%s411 + $0x8] sm:$0xff] %v837
        %s840 = sand.u32 %s239, 1
        %s841 = scalar_lea.sflag [#allocation4], %s840
        %s842 = sand.u32 %s239, 1
        %s843 = smul.addr %s842, 16
        %s844 = scalar_lea.vmem [#allocation8], %s843
        // Predicated region
        $region69: #{tpu_custom_call.1} parent=55 // pred_check
          %p845 = pneg %p249
        $region70: #{tpu_custom_call.1} parent=55 // pred_check_branch
          %847 = sbr.rel (%p845) target = $region72
        $region71: #{tpu_custom_call.1} parent=55 // pred_region
          %s848 = smul.u32 2, %s27
          %s850 = ssub.s32 256, 256
          %851 = vsyncadd %s841, %s850
          %s852 = smul.addr %s848, 128
          %s853 = scalar_lea.hbm %s9, %s852
          %s854 = sshll.u32 %s844, 4
          %s855 = int_to_ptr.vmem [resolvable:$true] %s854
          %860 = dma.vmem_to_hbm [thread:$0]  %s855, 256, %s853, %s841, 128, 128, 8
        $region72: #{tpu_custom_call.1} parent=55 // pred_fallthru
          _
      $region56: #{tpu_custom_call.1} parent=5 // pred_fallthru
        _
      %p861 = scmp.le.s32.totalorder 2, %s22
      // Predicated region
      $region73: #{tpu_custom_call.1} parent=5 // pred_check
        %p862 = pneg %p861
      $region74: #{tpu_custom_call.1} parent=5 // pred_check_branch
        %864 = sbr.rel (%p862) target = $region76
      $region75: #{tpu_custom_call.1} parent=5 // pred_region
        %s865 = ssub.s32 %s22, 2
        // Predicated region
        $region77: #{tpu_custom_call.1} parent=75 // pred_check
          %p866 = pneg %p255
        $region78: #{tpu_custom_call.1} parent=75 // pred_check_branch
          %868 = sbr.rel (%p866) target = $region80
        $region79: #{tpu_custom_call.1} parent=75 // pred_region
          %s869 = sand.u32 %s240, 1
          %s870 = scalar_lea.sflag [#allocation4], %s869
          %s871 = sand.u32 %s240, 1
          %s872 = smul.addr %s871, 16
          %s873 = scalar_lea.vmem [#allocation8], %s872
          %874 = dma.done %s870, 256
        $region80: #{tpu_custom_call.1} parent=75 // pred_fallthru
          _
      $region76: #{tpu_custom_call.1} parent=5 // pred_fallthru
        _
    $region6: #{tpu_custom_call.1} parent=1 // loop_footer
      %s26 = sadd.s32 1, %s22
    $region7: #{tpu_custom_call.1} parent=1 // loop_footer_branch
      %21 = sbr.rel target = $region3
    $region8: #{tpu_custom_call.1} parent=1 // loop_exit
      _
    %875 = vsyncpa [#allocation3], 1
    %s876 = scalar_lea.sflag [#allocation3], 1
    %877 = vsyncpa %s876, 1
    %878 = vsyncpa [#allocation6], 1
    %879 = vsyncpa [#allocation4], 1
    %s880 = scalar_lea.sflag [#allocation4], 1
    %881 = vsyncpa %s880, 1

</llo_original>
